<compile_context>
chip_gen: v5e
topology: v5e:2x2
jax: 0.10.0
libtpu: 0.0.40
codegen_flags: <defaults>
</compile_context>

<pallas_src>
import math
import functools

import jax
import jax.numpy as jnp
from jax import lax
from jax.experimental import pallas as pl
from jax.experimental.pallas import tpu as pltpu


def _layer_norm(z, gamma, beta, eps=1e-5):
    mu = jnp.mean(z, axis=-1, keepdims=True)
    var = jnp.mean((z - mu) ** 2, axis=-1, keepdims=True)
    return (z - mu) * lax.rsqrt(var + eps) * gamma + beta


def _bert_layer_kernel(x_ref, mask_ref,
                       wq_ref, bq_ref, wk_ref, bk_ref, wv_ref, bv_ref,
                       wo_ref, bo_ref, ln1g_ref, ln1b_ref,
                       w1_ref, b1_ref, w2_ref, b2_ref, ln2g_ref, ln2b_ref,
                       out_ref, *, n_heads):
    """One grid step == one encoder layer applied to one batch element's (S, D) rows.

    out_ref doubles as the activation carry: its block is resident across the
    (inner, sequential) layer axis for a fixed batch index.
    """
    layer = pl.program_id(1)

    # Seed the resident carry from the input on the first layer of this batch elem.
    @pl.when(layer == 0)
    def _():
        out_ref[0] = x_ref[0]

    S = out_ref.shape[1]
    D = out_ref.shape[2]
    H = n_heads
    dh = D // H
    f32 = jnp.float32
    cdt = wq_ref.dtype                      # compute dtype for MXU (bfloat16)

    h = out_ref[0]                          # (S, D) f32 activations (carry)
    hc = h.astype(cdt)

    # Dense QKV projections (bf16 operands, f32 accumulation on the MXU).
    q = jnp.dot(hc, wq_ref[0], preferred_element_type=f32) + bq_ref[0]
    k = jnp.dot(hc, wk_ref[0], preferred_element_type=f32) + bk_ref[0]
    v = jnp.dot(hc, wv_ref[0], preferred_element_type=f32) + bv_ref[0]
    q = q * f32(1.0 / math.sqrt(dh))        # fold score scaling into q

    # Head-batched attention: single relayout to (H, S, dh), then one batched
    # einsum for scores and one for p@v (no per-head stack/concat, no batch loop).
    q3 = jnp.transpose(q.astype(cdt).reshape(S, H, dh), (1, 0, 2))   # (H, S, dh)
    k3 = jnp.transpose(k.astype(cdt).reshape(S, H, dh), (1, 0, 2))
    v3 = jnp.transpose(v.astype(cdt).reshape(S, H, dh), (1, 0, 2))

    s = jnp.einsum("hqd,hkd->hqk", q3, k3,
                   preferred_element_type=f32)                       # (H, S, S) f32
    s = s + mask_ref[...]                   # (1, 1, S) additive mask, broadcasts
    s = s - jnp.max(s, axis=-1, keepdims=True)
    p = jnp.exp(s)
    p = p * pl.reciprocal(jnp.sum(p, axis=-1, keepdims=True), approx=True)
    ctx3 = jnp.einsum("hqk,hkd->hqd", p.astype(cdt), v3,
                      preferred_element_type=f32)                    # (H, S, dh) f32
    ctx = jnp.transpose(ctx3, (1, 0, 2)).reshape(S, D)               # (S, D)

    # Output projection over all heads at once.
    attn = jnp.dot(ctx.astype(cdt), wo_ref[0], preferred_element_type=f32) + bo_ref[0]

    # Add & LayerNorm 1 (f32 statistics, eps 1e-5, biased variance).
    h1 = _layer_norm(h + attn, ln1g_ref[0], ln1b_ref[0])

    # Position-wise FFN with erf-form GELU (f32 elementwise math).
    f = jnp.dot(h1.astype(cdt), w1_ref[0], preferred_element_type=f32) + b1_ref[0]
    f = 0.5 * f * (1.0 + lax.erf(f * f32(1.0 / math.sqrt(2.0))))
    f = jnp.dot(f.astype(cdt), w2_ref[0], preferred_element_type=f32) + b2_ref[0]

    # Add & LayerNorm 2; write back into the carry (stays in VMEM until the last
    # layer of this batch element, then Pallas flushes it to HBM as the output).
    out_ref[0] = _layer_norm(h1 + f, ln2g_ref[0], ln2b_ref[0])


def bert_forward(x, key_padding_mask, layer_params, n_heads,
                 compute_dtype=jnp.bfloat16):
    """Pallas BERT forward: x [B, S, D] f32 -> [B, S, D] f32."""
    B, S, D = x.shape
    L = len(layer_params)
    assert D % n_heads == 0
    d_fc = layer_params[0]["w1"].shape[1]

    if key_padding_mask is None:
        key_padding_mask = jnp.zeros((B, S), jnp.float32)
    # Additive mask, -1e9 on padded keys, shaped (B, 1, S) for clean TPU blocking.
    mask_neg = (key_padding_mask.astype(jnp.float32)
                * jnp.float32(-1e9)).reshape(B, 1, S)

    def stack(name, dtype):
        return jnp.stack([p[name] for p in layer_params], axis=0).astype(dtype)

    # Matmul weights in bf16 (MXU-native, half the weight DMA traffic); biases and
    # LayerNorm affine parameters stay f32.
    weights = [
        stack("wq", compute_dtype), stack("bq", jnp.float32),
        stack("wk", compute_dtype), stack("bk", jnp.float32),
        stack("wv", compute_dtype), stack("bv", jnp.float32),
        stack("wo", compute_dtype), stack("bo", jnp.float32),
        stack("ln1g", jnp.float32), stack("ln1b", jnp.float32),
        stack("w1", compute_dtype), stack("b1", jnp.float32),
        stack("w2", compute_dtype), stack("b2", jnp.float32),
        stack("ln2g", jnp.float32), stack("ln2b", jnp.float32),
    ]

    # Stacked weights are (L, a, b); one layer's slab per grid step, indexed by the
    # (inner, sequential) layer axis -> auto prefetch of layer l+1 during layer l.
    def wspec(arr):
        return pl.BlockSpec((1,) + arr.shape[1:], lambda b, l: (l, 0, 0))

    in_specs = ([pl.BlockSpec((1, S, D), lambda b, l: (b, 0, 0)),   # x (read at l==0)
                 pl.BlockSpec((1, 1, S), lambda b, l: (b, 0, 0))]   # additive mask
                + [wspec(w) for w in weights])
    out_spec = pl.BlockSpec((1, S, D), lambda b, l: (b, 0, 0))      # carry + output

    # Explicit scoped-VMEM budget, sized from the actual resident (double-buffered)
    # blocks plus headroom for in-kernel temporaries (q/k/v, scores, FFN hidden).
    tiled = [(x, (1, S, D)), (mask_neg, (1, 1, S))] + \
            [(w, (1,) + w.shape[1:]) for w in weights]
    resident = sum(2 * math.prod(blk) * a.dtype.itemsize for a, blk in tiled)
    resident += 2 * S * D * 4                         # output carry block
    working = 16 * S * max(D, d_fc) * 4               # temporaries headroom
    vmem_limit = int(min(64 << 20, max(16 << 20, 2 * (resident + working))))

    kernel = functools.partial(_bert_layer_kernel, n_heads=n_heads)

    out = pl.pallas_call(
        kernel,
        out_shape=jax.ShapeDtypeStruct((B, S, D), jnp.float32),
        grid=(B, L),
        in_specs=in_specs,
        out_specs=out_spec,
        compiler_params=pltpu.CompilerParams(
            dimension_semantics=("parallel", "arbitrary"),   # batch || , layers seq.
            vmem_limit_bytes=vmem_limit),
    )(x.astype(jnp.float32), mask_neg, *weights)

    return out


# ----------------------------- pure-JAX reference -----------------------------
def _ref_layer(x, mask, p, n_heads):
    B, S, D = x.shape
    dh = D // n_heads
    q = x @ p["wq"] + p["bq"]
    k = x @ p["wk"] + p["bk"]
    v = x @ p["wv"] + p["bv"]
    q = q.reshape(B, S, n_heads, dh).transpose(0, 2, 1, 3)
    k = k.reshape(B, S, n_heads, dh).transpose(0, 2, 1, 3)
    v = v.reshape(B, S, n_heads, dh).transpose(0, 2, 1, 3)
    s = jnp.einsum("bhqd,bhkd->bhqk", q, k) / math.sqrt(dh)
    s = s + mask[:, None, None, :] * -1e9
    a = jax.nn.softmax(s, axis=-1)
    ctx = jnp.einsum("bhqk,bhkd->bhqd", a, v).transpose(0, 2, 1, 3).reshape(B, S, D)
    attn = ctx @ p["wo"] + p["bo"]

    def ln(z, g, b):
        mu = jnp.mean(z, -1, keepdims=True)
        var = jnp.mean((z - mu) ** 2, -1, keepdims=True)
        return (z - mu) * lax.rsqrt(var + 1e-5) * g + b

    h = ln(x + attn, p["ln1g"], p["ln1b"])
    f = h @ p["w1"] + p["b1"]
    f = 0.5 * f * (1.0 + lax.erf(f / math.sqrt(2.0)))
    f = f @ p["w2"] + p["b2"]
    return ln(h + f, p["ln2g"], p["ln2b"])


def _ref_bert(x, mask, layer_params, n_heads):
    for p in layer_params:
        x = _ref_layer(x, mask, p, n_heads)
    return x


# ------------------------------- param init -----------------------------------
def init_layer_params(key, d_model, d_fc):
    ks = jax.random.split(key, 6)

    def lin(k, fi, fo):
        return (jax.random.normal(k, (fi, fo), jnp.float32) * 0.02,
                jnp.zeros((1, fo), jnp.float32))

    wq, bq = lin(ks[0], d_model, d_model)
    wk, bk = lin(ks[1], d_model, d_model)
    wv, bv = lin(ks[2], d_model, d_model)
    wo, bo = lin(ks[3], d_model, d_model)
    w1, b1 = lin(ks[4], d_model, d_fc)
    w2, b2 = lin(ks[5], d_fc, d_model)
    ones = jnp.ones((1, d_model), jnp.float32)
    zeros = jnp.zeros((1, d_model), jnp.float32)
    return dict(wq=wq, bq=bq, wk=wk, bk=bk, wv=wv, bv=bv, wo=wo, bo=bo,
                ln1g=ones, ln1b=zeros, w1=w1, b1=b1, w2=w2, b2=b2,
                ln2g=ones, ln2b=zeros)


if __name__ == "__main__":
    # Shapes implied by the module: BERT(d_model=32, d_fc=64, n_heads=4, n_layers=2)
    B, S, D, D_FC, N_HEADS, N_LAYERS = 2, 8, 32, 64, 4, 2

    root = jax.random.PRNGKey(0)
    kx, *layer_keys = jax.random.split(root, 1 + N_LAYERS)
    x = jax.random.normal(kx, (B, S, D), jnp.float32)

    # key_padding_mask: pad the last two keys of batch element 1.
    key_padding_mask = jnp.zeros((B, S), jnp.float32).at[1, -2:].set(1.0)

    layer_params = [init_layer_params(k, D, D_FC) for k in layer_keys]

    out = bert_forward(x, key_padding_mask, layer_params, N_HEADS)
    out = jax.block_until_ready(out)

    # f32 reference; bf16 matmuls + approx-reciprocal softmax => looser tolerance.
    ref = _ref_bert(x, key_padding_mask, layer_params, N_HEADS)
    assert out.shape == (B, S, D)
    assert jnp.allclose(out, ref, rtol=3e-2, atol=3e-2), "mismatch vs JAX reference"

    print("KERNEL_OK")
</pallas_src>

<mosaic_0001>
module attributes {stable_mosaic.version = 11 : i64} {
  func.func @_bert_layer_kernel(%arg0: i32, %arg1: i32, %arg2: memref<1x8x32xf32, #tpu.memory_space<vmem>>, %arg3: memref<1x1x8xf32, #tpu.memory_space<vmem>>, %arg4: memref<1x32x32xbf16, #tpu.memory_space<vmem>>, %arg5: memref<1x1x32xf32, #tpu.memory_space<vmem>>, %arg6: memref<1x32x32xbf16, #tpu.memory_space<vmem>>, %arg7: memref<1x1x32xf32, #tpu.memory_space<vmem>>, %arg8: memref<1x32x32xbf16, #tpu.memory_space<vmem>>, %arg9: memref<1x1x32xf32, #tpu.memory_space<vmem>>, %arg10: memref<1x32x32xbf16, #tpu.memory_space<vmem>>, %arg11: memref<1x1x32xf32, #tpu.memory_space<vmem>>, %arg12: memref<1x1x32xf32, #tpu.memory_space<vmem>>, %arg13: memref<1x1x32xf32, #tpu.memory_space<vmem>>, %arg14: memref<1x32x64xbf16, #tpu.memory_space<vmem>>, %arg15: memref<1x1x64xf32, #tpu.memory_space<vmem>>, %arg16: memref<1x64x32xbf16, #tpu.memory_space<vmem>>, %arg17: memref<1x1x32xf32, #tpu.memory_space<vmem>>, %arg18: memref<1x1x32xf32, #tpu.memory_space<vmem>>, %arg19: memref<1x1x32xf32, #tpu.memory_space<vmem>>, %arg20: memref<1x8x32xf32, #tpu.memory_space<vmem>>) attributes {dimension_semantics = [#tpu.dimension_semantics<parallel>, #tpu.dimension_semantics<arbitrary>], iteration_bounds = array<i64: 2, 2>, scalar_prefetch = 0 : i64, scratch_operands = 0 : i64, tpu.core_type = #tpu.core_type<tc>, window_params = [{transform_indices = @transform_0, window_bounds = array<i64: 1, 8, 32>}, {transform_indices = @transform_1, window_bounds = array<i64: 1, 1, 8>}, {transform_indices = @transform_2, window_bounds = array<i64: 1, 32, 32>}, {transform_indices = @transform_3, window_bounds = array<i64: 1, 1, 32>}, {transform_indices = @transform_4, window_bounds = array<i64: 1, 32, 32>}, {transform_indices = @transform_5, window_bounds = array<i64: 1, 1, 32>}, {transform_indices = @transform_6, window_bounds = array<i64: 1, 32, 32>}, {transform_indices = @transform_7, window_bounds = array<i64: 1, 1, 32>}, {transform_indices = @transform_8, window_bounds = array<i64: 1, 32, 32>}, {transform_indices = @transform_9, window_bounds = array<i64: 1, 1, 32>}, {transform_indices = @transform_10, window_bounds = array<i64: 1, 1, 32>}, {transform_indices = @transform_11, window_bounds = array<i64: 1, 1, 32>}, {transform_indices = @transform_12, window_bounds = array<i64: 1, 32, 64>}, {transform_indices = @transform_13, window_bounds = array<i64: 1, 1, 64>}, {transform_indices = @transform_14, window_bounds = array<i64: 1, 64, 32>}, {transform_indices = @transform_15, window_bounds = array<i64: 1, 1, 32>}, {transform_indices = @transform_16, window_bounds = array<i64: 1, 1, 32>}, {transform_indices = @transform_17, window_bounds = array<i64: 1, 1, 32>}, {transform_indices = @transform_18, window_bounds = array<i64: 1, 8, 32>}]} {
    %c0_i32 = arith.constant 0 : i32
    %0 = arith.cmpi eq, %arg1, %c0_i32 : i32
    %1 = arith.extui %0 : i1 to i32
    %c0_i32_0 = arith.constant 0 : i32
    %2 = arith.cmpi ne, %1, %c0_i32_0 : i32
    scf.if %2 {
      %c0_80 = arith.constant 0 : index
      %c0_81 = arith.constant 0 : index
      %c0_82 = arith.constant 0 : index
      %145 = vector.load %arg2[%c0_80, %c0_81, %c0_82] : memref<1x8x32xf32, #tpu.memory_space<vmem>>, vector<1x8x32xf32>
      %146 = vector.shape_cast %145 : vector<1x8x32xf32> to vector<8x32xf32>
      %c0_83 = arith.constant 0 : index
      %c0_84 = arith.constant 0 : index
      %c0_85 = arith.constant 0 : index
      %147 = vector.load %arg20[%c0_83, %c0_84, %c0_85] : memref<1x8x32xf32, #tpu.memory_space<vmem>>, vector<1x8x32xf32>
      %148 = vector.shape_cast %147 : vector<1x8x32xf32> to vector<8x32xf32>
      %149 = vector.shape_cast %146 : vector<8x32xf32> to vector<1x8x32xf32>
      tpu.vector_store %arg20[%c0_83, %c0_84, %c0_85], %149 {strides = array<i32>} : memref<1x8x32xf32, #tpu.memory_space<vmem>>, vector<1x8x32xf32>,
    } else {
    }
    %c0 = arith.constant 0 : index
    %c0_1 = arith.constant 0 : index
    %c0_2 = arith.constant 0 : index
    %3 = vector.load %arg20[%c0, %c0_1, %c0_2] : memref<1x8x32xf32, #tpu.memory_space<vmem>>, vector<1x8x32xf32>
    %4 = vector.shape_cast %3 : vector<1x8x32xf32> to vector<8x32xf32>
    %5 = arith.truncf %4 : vector<8x32xf32> to vector<8x32xbf16>
    %c0_3 = arith.constant 0 : index
    %c0_4 = arith.constant 0 : index
    %c0_5 = arith.constant 0 : index
    %6 = vector.load %arg4[%c0_3, %c0_4, %c0_5] : memref<1x32x32xbf16, #tpu.memory_space<vmem>>, vector<1x32x32xbf16>
    %7 = vector.shape_cast %6 : vector<1x32x32xbf16> to vector<32x32xbf16>
    %cst = arith.constant dense<0.000000e+00> : vector<8x32xf32>
    %8 = tpu.matmul %5, %7, %cst {dimension_numbers = #tpu.dot_dimension_numbers<[1], [0], [0], [1], [0, 0, 1, 1], [], []>} : vector<8x32xbf16>, vector<32x32xbf16>, vector<8x32xf32> -> vector<8x32xf32>
    %c0_6 = arith.constant 0 : index
    %c0_7 = arith.constant 0 : index
    %c0_8 = arith.constant 0 : index
    %9 = vector.load %arg5[%c0_6, %c0_7, %c0_8] : memref<1x1x32xf32, #tpu.memory_space<vmem>>, vector<1x1x32xf32>
    %10 = vector.shape_cast %9 : vector<1x1x32xf32> to vector<1x32xf32>
    %11 = vector.broadcast %10 : vector<1x32xf32> to vector<8x32xf32>
    %12 = arith.addf %8, %11 : vector<8x32xf32>
    %c0_9 = arith.constant 0 : index
    %c0_10 = arith.constant 0 : index
    %c0_11 = arith.constant 0 : index
    %13 = vector.load %arg6[%c0_9, %c0_10, %c0_11] : memref<1x32x32xbf16, #tpu.memory_space<vmem>>, vector<1x32x32xbf16>
    %14 = vector.shape_cast %13 : vector<1x32x32xbf16> to vector<32x32xbf16>
    %cst_12 = arith.constant dense<0.000000e+00> : vector<8x32xf32>
    %15 = tpu.matmul %5, %14, %cst_12 {dimension_numbers = #tpu.dot_dimension_numbers<[1], [0], [0], [1], [0, 0, 1, 1], [], []>} : vector<8x32xbf16>, vector<32x32xbf16>, vector<8x32xf32> -> vector<8x32xf32>
    %c0_13 = arith.constant 0 : index
    %c0_14 = arith.constant 0 : index
    %c0_15 = arith.constant 0 : index
    %16 = vector.load %arg7[%c0_13, %c0_14, %c0_15] : memref<1x1x32xf32, #tpu.memory_space<vmem>>, vector<1x1x32xf32>
    %17 = vector.shape_cast %16 : vector<1x1x32xf32> to vector<1x32xf32>
    %18 = vector.broadcast %17 : vector<1x32xf32> to vector<8x32xf32>
    %19 = arith.addf %15, %18 : vector<8x32xf32>
    %c0_16 = arith.constant 0 : index
    %c0_17 = arith.constant 0 : index
    %c0_18 = arith.constant 0 : index
    %20 = vector.load %arg8[%c0_16, %c0_17, %c0_18] : memref<1x32x32xbf16, #tpu.memory_space<vmem>>, vector<1x32x32xbf16>
    %21 = vector.shape_cast %20 : vector<1x32x32xbf16> to vector<32x32xbf16>
    %cst_19 = arith.constant dense<0.000000e+00> : vector<8x32xf32>
    %22 = tpu.matmul %5, %21, %cst_19 {dimension_numbers = #tpu.dot_dimension_numbers<[1], [0], [0], [1], [0, 0, 1, 1], [], []>} : vector<8x32xbf16>, vector<32x32xbf16>, vector<8x32xf32> -> vector<8x32xf32>
    %c0_20 = arith.constant 0 : index
    %c0_21 = arith.constant 0 : index
    %c0_22 = arith.constant 0 : index
    %23 = vector.load %arg9[%c0_20, %c0_21, %c0_22] : memref<1x1x32xf32, #tpu.memory_space<vmem>>, vector<1x1x32xf32>
    %24 = vector.shape_cast %23 : vector<1x1x32xf32> to vector<1x32xf32>
    %25 = vector.broadcast %24 : vector<1x32xf32> to vector<8x32xf32>
    %26 = arith.addf %22, %25 : vector<8x32xf32>
    %cst_23 = arith.constant 0.353553385 : f32
    %27 = vector.broadcast %cst_23 : f32 to vector<8x32xf32>
    %28 = arith.mulf %12, %27 : vector<8x32xf32>
    %29 = arith.truncf %28 : vector<8x32xf32> to vector<8x32xbf16>
    %30 = vector.shape_cast %29 : vector<8x32xbf16> to vector<8x4x8xbf16>
    %31 = tpu.transpose %30, [1, 0, 2] : vector<8x4x8xbf16> -> vector<4x8x8xbf16>
    %32 = arith.truncf %19 : vector<8x32xf32> to vector<8x32xbf16>
    %33 = vector.shape_cast %32 : vector<8x32xbf16> to vector<8x4x8xbf16>
    %34 = tpu.transpose %33, [1, 0, 2] : vector<8x4x8xbf16> -> vector<4x8x8xbf16>
    %35 = arith.truncf %26 : vector<8x32xf32> to vector<8x32xbf16>
    %36 = vector.shape_cast %35 : vector<8x32xbf16> to vector<8x4x8xbf16>
    %37 = tpu.transpose %36, [1, 0, 2] : vector<8x4x8xbf16> -> vector<4x8x8xbf16>
    "tpu.trace_start"() <{level = 10 : i32, message = "hqd,hkd->hqk"}> : () -> ()
    %cst_24 = arith.constant dense<0.000000e+00> : vector<4x8x8xf32>
    %38 = tpu.matmul %31, %34, %cst_24 {dimension_numbers = #tpu.dot_dimension_numbers<[2], [2], [1], [1], [0, 0, 0, 1, 1, 1], [0], [0]>} : vector<4x8x8xbf16>, vector<4x8x8xbf16>, vector<4x8x8xf32> -> vector<4x8x8xf32>
    "tpu.trace_stop"() : () -> ()
    %c0_25 = arith.constant 0 : index
    %c0_26 = arith.constant 0 : index
    %c0_27 = arith.constant 0 : index
    %39 = vector.load %arg3[%c0_25, %c0_26, %c0_27] : memref<1x1x8xf32, #tpu.memory_space<vmem>>, vector<1x1x8xf32>
    %40 = vector.broadcast %39 : vector<1x1x8xf32> to vector<4x8x8xf32>
    %41 = arith.addf %38, %40 : vector<4x8x8xf32>
    %cst_28 = arith.constant dense<0xFF800000> : vector<4x8xf32>
    %42 = vector.multi_reduction <maximumf>, %41, %cst_28 [2] : vector<4x8x8xf32> to vector<4x8xf32>
    %43 = vector.shape_cast %42 : vector<4x8xf32> to vector<4x8x1xf32>
    %44 = vector.broadcast %43 : vector<4x8x1xf32> to vector<4x8x8xf32>
    %45 = arith.subf %41, %44 : vector<4x8x8xf32>
    %46 = math.exp %45 : vector<4x8x8xf32>
    %cst_29 = arith.constant dense<0.000000e+00> : vector<4x8xf32>
    %47 = vector.multi_reduction <add>, %46, %cst_29 [2] : vector<4x8x8xf32> to vector<4x8xf32>
    %48 = vector.shape_cast %47 : vector<4x8xf32> to vector<4x8x1xf32>
    %49 = tpu.reciprocal %48 {approx = true} : vector<4x8x1xf32> -> vector<4x8x1xf32>
    %50 = vector.broadcast %49 : vector<4x8x1xf32> to vector<4x8x8xf32>
    %51 = arith.mulf %46, %50 : vector<4x8x8xf32>
    %52 = arith.truncf %51 : vector<4x8x8xf32> to vector<4x8x8xbf16>
    "tpu.trace_start"() <{level = 10 : i32, message = "hqk,hkd->hqd"}> : () -> ()
    %cst_30 = arith.constant dense<0.000000e+00> : vector<4x8x8xf32>
    %53 = tpu.matmul %52, %37, %cst_30 {dimension_numbers = #tpu.dot_dimension_numbers<[2], [1], [1], [2], [0, 0, 0, 1, 1, 2], [0], [0]>} : vector<4x8x8xbf16>, vector<4x8x8xbf16>, vector<4x8x8xf32> -> vector<4x8x8xf32>
    "tpu.trace_stop"() : () -> ()
    %54 = tpu.transpose %53, [1, 0, 2] : vector<4x8x8xf32> -> vector<8x4x8xf32>
    %55 = vector.shape_cast %54 : vector<8x4x8xf32> to vector<8x32xf32>
    %56 = arith.truncf %55 : vector<8x32xf32> to vector<8x32xbf16>
    %c0_31 = arith.constant 0 : index
    %c0_32 = arith.constant 0 : index
    %c0_33 = arith.constant 0 : index
    %57 = vector.load %arg10[%c0_31, %c0_32, %c0_33] : memref<1x32x32xbf16, #tpu.memory_space<vmem>>, vector<1x32x32xbf16>
    %58 = vector.shape_cast %57 : vector<1x32x32xbf16> to vector<32x32xbf16>
    %cst_34 = arith.constant dense<0.000000e+00> : vector<8x32xf32>
    %59 = tpu.matmul %56, %58, %cst_34 {dimension_numbers = #tpu.dot_dimension_numbers<[1], [0], [0], [1], [0, 0, 1, 1], [], []>} : vector<8x32xbf16>, vector<32x32xbf16>, vector<8x32xf32> -> vector<8x32xf32>
    %c0_35 = arith.constant 0 : index
    %c0_36 = arith.constant 0 : index
    %c0_37 = arith.constant 0 : index
    %60 = vector.load %arg11[%c0_35, %c0_36, %c0_37] : memref<1x1x32xf32, #tpu.memory_space<vmem>>, vector<1x1x32xf32>
    %61 = vector.shape_cast %60 : vector<1x1x32xf32> to vector<1x32xf32>
    %62 = vector.broadcast %61 : vector<1x32xf32> to vector<8x32xf32>
    %63 = arith.addf %59, %62 : vector<8x32xf32>
    %64 = arith.addf %4, %63 : vector<8x32xf32>
    %c0_38 = arith.constant 0 : index
    %c0_39 = arith.constant 0 : index
    %c0_40 = arith.constant 0 : index
    %65 = vector.load %arg12[%c0_38, %c0_39, %c0_40] : memref<1x1x32xf32, #tpu.memory_space<vmem>>, vector<1x1x32xf32>
    %66 = vector.shape_cast %65 : vector<1x1x32xf32> to vector<1x32xf32>
    %c0_41 = arith.constant 0 : index
    %c0_42 = arith.constant 0 : index
    %c0_43 = arith.constant 0 : index
    %67 = vector.load %arg13[%c0_41, %c0_42, %c0_43] : memref<1x1x32xf32, #tpu.memory_space<vmem>>, vector<1x1x32xf32>
    %68 = vector.shape_cast %67 : vector<1x1x32xf32> to vector<1x32xf32>
    %cst_44 = arith.constant dense<0.000000e+00> : vector<8xf32>
    %69 = vector.multi_reduction <add>, %64, %cst_44 [1] : vector<8x32xf32> to vector<8xf32>
    %70 = vector.shape_cast %69 : vector<8xf32> to vector<8x1xf32>
    %cst_45 = arith.constant 3.200000e+01 : f32
    %71 = vector.broadcast %cst_45 : f32 to vector<8x1xf32>
    %72 = arith.divf %70, %71 : vector<8x1xf32>
    %73 = vector.broadcast %72 : vector<8x1xf32> to vector<8x32xf32>
    %74 = arith.subf %64, %73 : vector<8x32xf32>
    %75 = arith.mulf %74, %74 : vector<8x32xf32>
    %cst_46 = arith.constant dense<0.000000e+00> : vector<8xf32>
    %76 = vector.multi_reduction <add>, %75, %cst_46 [1] : vector<8x32xf32> to vector<8xf32>
    %77 = vector.shape_cast %76 : vector<8xf32> to vector<8x1xf32>
    %cst_47 = arith.constant 3.200000e+01 : f32
    %78 = vector.broadcast %cst_47 : f32 to vector<8x1xf32>
    %79 = arith.divf %77, %78 : vector<8x1xf32>
    %80 = vector.broadcast %72 : vector<8x1xf32> to vector<8x32xf32>
    %81 = arith.subf %64, %80 : vector<8x32xf32>
    %cst_48 = arith.constant 9.99999974E-6 : f32
    %82 = vector.broadcast %cst_48 : f32 to vector<8x1xf32>
    %83 = arith.addf %79, %82 : vector<8x1xf32>
    %84 = math.rsqrt %83 : vector<8x1xf32>
    %85 = vector.broadcast %84 : vector<8x1xf32> to vector<8x32xf32>
    %86 = arith.mulf %81, %85 : vector<8x32xf32>
    %87 = vector.broadcast %66 : vector<1x32xf32> to vector<8x32xf32>
    %88 = arith.mulf %86, %87 : vector<8x32xf32>
    %89 = vector.broadcast %68 : vector<1x32xf32> to vector<8x32xf32>
    %90 = arith.addf %88, %89 : vector<8x32xf32>
    %91 = arith.truncf %90 : vector<8x32xf32> to vector<8x32xbf16>
    %c0_49 = arith.constant 0 : index
    %c0_50 = arith.constant 0 : index
    %c0_51 = arith.constant 0 : index
    %92 = vector.load %arg14[%c0_49, %c0_50, %c0_51] : memref<1x32x64xbf16, #tpu.memory_space<vmem>>, vector<1x32x64xbf16>
    %93 = vector.shape_cast %92 : vector<1x32x64xbf16> to vector<32x64xbf16>
    %cst_52 = arith.constant dense<0.000000e+00> : vector<8x64xf32>
    %94 = tpu.matmul %91, %93, %cst_52 {dimension_numbers = #tpu.dot_dimension_numbers<[1], [0], [0], [1], [0, 0, 1, 1], [], []>} : vector<8x32xbf16>, vector<32x64xbf16>, vector<8x64xf32> -> vector<8x64xf32>
    %c0_53 = arith.constant 0 : index
    %c0_54 = arith.constant 0 : index
    %c0_55 = arith.constant 0 : index
    %95 = vector.load %arg15[%c0_53, %c0_54, %c0_55] : memref<1x1x64xf32, #tpu.memory_space<vmem>>, vector<1x1x64xf32>
    %96 = vector.shape_cast %95 : vector<1x1x64xf32> to vector<1x64xf32>
    %97 = vector.broadcast %96 : vector<1x64xf32> to vector<8x64xf32>
    %98 = arith.addf %94, %97 : vector<8x64xf32>
    %cst_56 = arith.constant 5.000000e-01 : f32
    %99 = vector.broadcast %cst_56 : f32 to vector<8x64xf32>
    %100 = arith.mulf %99, %98 : vector<8x64xf32>
    %cst_57 = arith.constant 0.707106769 : f32
    %101 = vector.broadcast %cst_57 : f32 to vector<8x64xf32>
    %102 = arith.mulf %98, %101 : vector<8x64xf32>
    %103 = math.erf %102 : vector<8x64xf32>
    %cst_58 = arith.constant 1.000000e+00 : f32
    %104 = vector.broadcast %cst_58 : f32 to vector<8x64xf32>
    %105 = arith.addf %104, %103 : vector<8x64xf32>
    %106 = arith.mulf %100, %105 : vector<8x64xf32>
    %107 = arith.truncf %106 : vector<8x64xf32> to vector<8x64xbf16>
    %c0_59 = arith.constant 0 : index
    %c0_60 = arith.constant 0 : index
    %c0_61 = arith.constant 0 : index
    %108 = vector.load %arg16[%c0_59, %c0_60, %c0_61] : memref<1x64x32xbf16, #tpu.memory_space<vmem>>, vector<1x64x32xbf16>
    %109 = vector.shape_cast %108 : vector<1x64x32xbf16> to vector<64x32xbf16>
    %cst_62 = arith.constant dense<0.000000e+00> : vector<8x32xf32>
    %110 = tpu.matmul %107, %109, %cst_62 {dimension_numbers = #tpu.dot_dimension_numbers<[1], [0], [0], [1], [0, 0, 1, 1], [], []>} : vector<8x64xbf16>, vector<64x32xbf16>, vector<8x32xf32> -> vector<8x32xf32>
    %c0_63 = arith.constant 0 : index
    %c0_64 = arith.constant 0 : index
    %c0_65 = arith.constant 0 : index
    %111 = vector.load %arg17[%c0_63, %c0_64, %c0_65] : memref<1x1x32xf32, #tpu.memory_space<vmem>>, vector<1x1x32xf32>
    %112 = vector.shape_cast %111 : vector<1x1x32xf32> to vector<1x32xf32>
    %113 = vector.broadcast %112 : vector<1x32xf32> to vector<8x32xf32>
    %114 = arith.addf %110, %113 : vector<8x32xf32>
    %115 = arith.addf %90, %114 : vector<8x32xf32>
    %c0_66 = arith.constant 0 : index
    %c0_67 = arith.constant 0 : index
    %c0_68 = arith.constant 0 : index
    %116 = vector.load %arg18[%c0_66, %c0_67, %c0_68] : memref<1x1x32xf32, #tpu.memory_space<vmem>>, vector<1x1x32xf32>
    %117 = vector.shape_cast %116 : vector<1x1x32xf32> to vector<1x32xf32>
    %c0_69 = arith.constant 0 : index
    %c0_70 = arith.constant 0 : index
    %c0_71 = arith.constant 0 : index
    %118 = vector.load %arg19[%c0_69, %c0_70, %c0_71] : memref<1x1x32xf32, #tpu.memory_space<vmem>>, vector<1x1x32xf32>
    %119 = vector.shape_cast %118 : vector<1x1x32xf32> to vector<1x32xf32>
    %cst_72 = arith.constant dense<0.000000e+00> : vector<8xf32>
    %120 = vector.multi_reduction <add>, %115, %cst_72 [1] : vector<8x32xf32> to vector<8xf32>
    %121 = vector.shape_cast %120 : vector<8xf32> to vector<8x1xf32>
    %cst_73 = arith.constant 3.200000e+01 : f32
    %122 = vector.broadcast %cst_73 : f32 to vector<8x1xf32>
    %123 = arith.divf %121, %122 : vector<8x1xf32>
    %124 = vector.broadcast %123 : vector<8x1xf32> to vector<8x32xf32>
    %125 = arith.subf %115, %124 : vector<8x32xf32>
    %126 = arith.mulf %125, %125 : vector<8x32xf32>
    %cst_74 = arith.constant dense<0.000000e+00> : vector<8xf32>
    %127 = vector.multi_reduction <add>, %126, %cst_74 [1] : vector<8x32xf32> to vector<8xf32>
    %128 = vector.shape_cast %127 : vector<8xf32> to vector<8x1xf32>
    %cst_75 = arith.constant 3.200000e+01 : f32
    %129 = vector.broadcast %cst_75 : f32 to vector<8x1xf32>
    %130 = arith.divf %128, %129 : vector<8x1xf32>
    %131 = vector.broadcast %123 : vector<8x1xf32> to vector<8x32xf32>
    %132 = arith.subf %115, %131 : vector<8x32xf32>
    %cst_76 = arith.constant 9.99999974E-6 : f32
    %133 = vector.broadcast %cst_76 : f32 to vector<8x1xf32>
    %134 = arith.addf %130, %133 : vector<8x1xf32>
    %135 = math.rsqrt %134 : vector<8x1xf32>
    %136 = vector.broadcast %135 : vector<8x1xf32> to vector<8x32xf32>
    %137 = arith.mulf %132, %136 : vector<8x32xf32>
    %138 = vector.broadcast %117 : vector<1x32xf32> to vector<8x32xf32>
    %139 = arith.mulf %137, %138 : vector<8x32xf32>
    %140 = vector.broadcast %119 : vector<1x32xf32> to vector<8x32xf32>
    %141 = arith.addf %139, %140 : vector<8x32xf32>
    %c0_77 = arith.constant 0 : index
    %c0_78 = arith.constant 0 : index
    %c0_79 = arith.constant 0 : index
    %142 = vector.load %arg20[%c0_77, %c0_78, %c0_79] : memref<1x8x32xf32, #tpu.memory_space<vmem>>, vector<1x8x32xf32>
    %143 = vector.shape_cast %142 : vector<1x8x32xf32> to vector<8x32xf32>
    %144 = vector.shape_cast %141 : vector<8x32xf32> to vector<1x8x32xf32>
    tpu.vector_store %arg20[%c0_77, %c0_78, %c0_79], %144 {strides = array<i32>} : memref<1x8x32xf32, #tpu.memory_space<vmem>>, vector<1x8x32xf32>,
    return
  }
  func.func @transform_0(%arg0: i32, %arg1: i32) -> (i32, i32, i32) {
    %c0_i32 = arith.constant 0 : i32
    %c0_i32_0 = arith.constant 0 : i32
    %c0_i32_1 = arith.constant 0 : i32
    return %arg0, %c0_i32, %c0_i32_0 : i32, i32, i32
  }
  func.func @transform_1(%arg0: i32, %arg1: i32) -> (i32, i32, i32) {
    %c0_i32 = arith.constant 0 : i32
    %c0_i32_0 = arith.constant 0 : i32
    %c0_i32_1 = arith.constant 0 : i32
    return %arg0, %c0_i32, %c0_i32_0 : i32, i32, i32
  }
  func.func @transform_2(%arg0: i32, %arg1: i32) -> (i32, i32, i32) {
    %c0_i32 = arith.constant 0 : i32
    %c0_i32_0 = arith.constant 0 : i32
    %c0_i32_1 = arith.constant 0 : i32
    return %arg1, %c0_i32, %c0_i32_0 : i32, i32, i32
  }
  func.func @transform_3(%arg0: i32, %arg1: i32) -> (i32, i32, i32) {
    %c0_i32 = arith.constant 0 : i32
    %c0_i32_0 = arith.constant 0 : i32
    %c0_i32_1 = arith.constant 0 : i32
    return %arg1, %c0_i32, %c0_i32_0 : i32, i32, i32
  }
  func.func @transform_4(%arg0: i32, %arg1: i32) -> (i32, i32, i32) {
    %c0_i32 = arith.constant 0 : i32
    %c0_i32_0 = arith.constant 0 : i32
    %c0_i32_1 = arith.constant 0 : i32
    return %arg1, %c0_i32, %c0_i32_0 : i32, i32, i32
  }
  func.func @transform_5(%arg0: i32, %arg1: i32) -> (i32, i32, i32) {
    %c0_i32 = arith.constant 0 : i32
    %c0_i32_0 = arith.constant 0 : i32
    %c0_i32_1 = arith.constant 0 : i32
    return %arg1, %c0_i32, %c0_i32_0 : i32, i32, i32
  }
  func.func @transform_6(%arg0: i32, %arg1: i32) -> (i32, i32, i32) {
    %c0_i32 = arith.constant 0 : i32
    %c0_i32_0 = arith.constant 0 : i32
    %c0_i32_1 = arith.constant 0 : i32
    return %arg1, %c0_i32, %c0_i32_0 : i32, i32, i32
  }
  func.func @transform_7(%arg0: i32, %arg1: i32) -> (i32, i32, i32) {
    %c0_i32 = arith.constant 0 : i32
    %c0_i32_0 = arith.constant 0 : i32
    %c0_i32_1 = arith.constant 0 : i32
    return %arg1, %c0_i32, %c0_i32_0 : i32, i32, i32
  }
  func.func @transform_8(%arg0: i32, %arg1: i32) -> (i32, i32, i32) {
    %c0_i32 = arith.constant 0 : i32
    %c0_i32_0 = arith.constant 0 : i32
    %c0_i32_1 = arith.constant 0 : i32
    return %arg1, %c0_i32, %c0_i32_0 : i32, i32, i32
  }
  func.func @transform_9(%arg0: i32, %arg1: i32) -> (i32, i32, i32) {
    %c0_i32 = arith.constant 0 : i32
    %c0_i32_0 = arith.constant 0 : i32
    %c0_i32_1 = arith.constant 0 : i32
    return %arg1, %c0_i32, %c0_i32_0 : i32, i32, i32
  }
  func.func @transform_10(%arg0: i32, %arg1: i32) -> (i32, i32, i32) {
    %c0_i32 = arith.constant 0 : i32
    %c0_i32_0 = arith.constant 0 : i32
    %c0_i32_1 = arith.constant 0 : i32
    return %arg1, %c0_i32, %c0_i32_0 : i32, i32, i32
  }
  func.func @transform_11(%arg0: i32, %arg1: i32) -> (i32, i32, i32) {
    %c0_i32 = arith.constant 0 : i32
    %c0_i32_0 = arith.constant 0 : i32
    %c0_i32_1 = arith.constant 0 : i32
    return %arg1, %c0_i32, %c0_i32_0 : i32, i32, i32
  }
  func.func @transform_12(%arg0: i32, %arg1: i32) -> (i32, i32, i32) {
    %c0_i32 = arith.constant 0 : i32
    %c0_i32_0 = arith.constant 0 : i32
    %c0_i32_1 = arith.constant 0 : i32
    return %arg1, %c0_i32, %c0_i32_0 : i32, i32, i32
  }
  func.func @transform_13(%arg0: i32, %arg1: i32) -> (i32, i32, i32) {
    %c0_i32 = arith.constant 0 : i32
    %c0_i32_0 = arith.constant 0 : i32
    %c0_i32_1 = arith.constant 0 : i32
    return %arg1, %c0_i32, %c0_i32_0 : i32, i32, i32
  }
  func.func @transform_14(%arg0: i32, %arg1: i32) -> (i32, i32, i32) {
    %c0_i32 = arith.constant 0 : i32
    %c0_i32_0 = arith.constant 0 : i32
    %c0_i32_1 = arith.constant 0 : i32
    return %arg1, %c0_i32, %c0_i32_0 : i32, i32, i32
  }
  func.func @transform_15(%arg0: i32, %arg1: i32) -> (i32, i32, i32) {
    %c0_i32 = arith.constant 0 : i32
    %c0_i32_0 = arith.constant 0 : i32
    %c0_i32_1 = arith.constant 0 : i32
    return %arg1, %c0_i32, %c0_i32_0 : i32, i32, i32
  }
  func.func @transform_16(%arg0: i32, %arg1: i32) -> (i32, i32, i32) {
    %c0_i32 = arith.constant 0 : i32
    %c0_i32_0 = arith.constant 0 : i32
    %c0_i32_1 = arith.constant 0 : i32
    return %arg1, %c0_i32, %c0_i32_0 : i32, i32, i32
  }
  func.func @transform_17(%arg0: i32, %arg1: i32) -> (i32, i32, i32) {
    %c0_i32 = arith.constant 0 : i32
    %c0_i32_0 = arith.constant 0 : i32
    %c0_i32_1 = arith.constant 0 : i32
    return %arg1, %c0_i32, %c0_i32_0 : i32, i32, i32
  }
  func.func @transform_18(%arg0: i32, %arg1: i32) -> (i32, i32, i32) {
    %c0_i32 = arith.constant 0 : i32
    %c0_i32_0 = arith.constant 0 : i32
    %c0_i32_1 = arith.constant 0 : i32
    return %arg0, %c0_i32, %c0_i32_0 : i32, i32, i32
  }
}

</mosaic_0001>

<llo_original>
// kernel: tpu_custom_call.1
$region0: #{tpu_custom_call.1}
  #allocation0 [shape = 'u32[]', space=smem, size = 0x4, offset = 0x4, fixed_abs, tag = 'smem constant byte address 0x4 - core index']
  #allocation1 [shape = 'u32[72,128]{1,0:T(1,128)}', space=vmem, size = 0x9000, scoped, tag = 'internal scratch']
  %s0 = inlined_call_operand.hbm [shape: f32[2,8,32], index: 0, kind: input, shape index: {}]
  %s1 = inlined_call_operand.hbm [shape: f32[2,1,8], index: 1, kind: input, shape index: {}]
  %s2 = inlined_call_operand.vmem [shape: bf16[2,32,32], index: 2, kind: input, shape index: {}]
  %s3 = inlined_call_operand.hbm [shape: f32[2,1,32], index: 3, kind: input, shape index: {}]
  %s4 = inlined_call_operand.vmem [shape: bf16[2,32,32], index: 4, kind: input, shape index: {}]
  %s5 = inlined_call_operand.vmem [shape: f32[2,1,32], index: 5, kind: input, shape index: {}]
  %s6 = inlined_call_operand.vmem [shape: bf16[2,32,32], index: 6, kind: input, shape index: {}]
  %s7 = inlined_call_operand.vmem [shape: f32[2,1,32], index: 7, kind: input, shape index: {}]
  %s8 = inlined_call_operand.hbm [shape: bf16[2,32,32], index: 8, kind: input, shape index: {}]
  %s9 = inlined_call_operand.vmem [shape: f32[2,1,32], index: 9, kind: input, shape index: {}]
  %s10 = inlined_call_operand.vmem [shape: f32[2,1,32], index: 10, kind: input, shape index: {}]
  %s11 = inlined_call_operand.hbm [shape: f32[2,1,32], index: 11, kind: input, shape index: {}]
  %s12 = inlined_call_operand.hbm [shape: bf16[2,32,64], index: 12, kind: input, shape index: {}]
  %s13 = inlined_call_operand.vmem [shape: f32[2,1,64], index: 13, kind: input, shape index: {}]
  %s14 = inlined_call_operand.vmem [shape: bf16[2,64,32], index: 14, kind: input, shape index: {}]
  %s15 = inlined_call_operand.vmem [shape: f32[2,1,32], index: 15, kind: input, shape index: {}]
  %s16 = inlined_call_operand.vmem [shape: f32[2,1,32], index: 16, kind: input, shape index: {}]
  %s17 = inlined_call_operand.hbm [shape: f32[2,1,32], index: 17, kind: input, shape index: {}]
  %s18 = inlined_call_operand.hbm [shape: f32[2,8,32], index: 18, kind: output, shape index: {}]
  %s19 = sld [smem:[#allocation0]]
  $region137: #{tpu_custom_call.1} parent=0
    _
  %s21 = ssub.s32 1, %s19
  %s22 = scalar_select 0, %s21, %s19
  $region1: #{tpu_custom_call.1} parent=0
    #allocation2 [shape = 'u8[8192]{0}', space=vmem, size = 0x2000, scoped, tag = 'input window, operand 0']
    #allocation3 [shape = 's32[2]{0}', space=sflag, size = 0x8, scoped, tag = 'scoped memory for tpu_custom_call.1']
    #allocation4 [shape = 's32[2]{0}', space=sflag, size = 0x8, scoped, tag = 'scoped memory for tpu_custom_call.1']
    #allocation5 [shape = 'u8[1024]{0}', space=vmem, size = 0x400, scoped, tag = 'input window, operand 1']
    #allocation6 [shape = 's32[2]{0}', space=sflag, size = 0x8, scoped, tag = 'scoped memory for tpu_custom_call.1']
    #allocation7 [shape = 'u8[1024]{0}', space=vmem, size = 0x400, scoped, tag = 'input window, operand 3']
    #allocation8 [shape = 'u8[16384]{0}', space=vmem, size = 0x4000, scoped, tag = 'input window, operand 8']
    #allocation9 [shape = 's32[2]{0}', space=sflag, size = 0x8, scoped, tag = 'scoped memory for tpu_custom_call.1']
    #allocation10 [shape = 'u8[1024]{0}', space=vmem, size = 0x400, scoped, tag = 'input window, operand 11']
    #allocation11 [shape = 'u8[16384]{0}', space=vmem, size = 0x4000, scoped, tag = 'input window, operand 12']
    #allocation12 [shape = 's32[2]{0}', space=sflag, size = 0x8, scoped, tag = 'scoped memory for tpu_custom_call.1']
    #allocation13 [shape = 'u8[1024]{0}', space=vmem, size = 0x400, scoped, tag = 'input window, operand 17']
    #allocation14 [shape = 'u8[8192]{0}', space=vmem, size = 0x2000, scoped, tag = 'output window, operand 0']
    %23 = vsyncpa [#allocation3], 0
    %s24 = scalar_lea.sflag [#allocation3], 1
    %25 = vsyncpa %s24, 0
    %26 = vsyncpa [#allocation6], 0
    %s27 = scalar_lea.sflag [#allocation6], 1
    %28 = vsyncpa %s27, 0
    %29 = vsyncpa [#allocation9], 0
    %s30 = scalar_lea.sflag [#allocation9], 1
    %31 = vsyncpa %s30, 0
    %32 = vsyncpa [#allocation12], 0
    %s33 = scalar_lea.sflag [#allocation12], 1
    %34 = vsyncpa %s33, 0
    %35 = vsyncpa [#allocation4], 0
    %s36 = scalar_lea.sflag [#allocation4], 1
    %37 = vsyncpa %s36, 0
    loop: start=0, step=1, limit=6
    $region2: #{tpu_custom_call.1} parent=1 // loop_pre_header
      _
    $region3: #{tpu_custom_call.1} parent=1 // loop_header
      %s39 = sphi 0, %s43
      %p40 = scmp.ge.s32.totalorder %s39, 6
      %s46 = sphi 0, %s58
      %s47 = sphi 0, %s54
      %s48 = sphi 0, %s46
      %s49 = sphi 0, %s47
      %s50 = sphi 0, %s48
      %s51 = sphi 0, %s49
      %s61 = sphi 0, %s63
      %s64 = sphi 0, %s61
      %s65 = sphi 0, %s64
      %s81 = sphi 0, %s65
      %s87 = sphi 0, %s89
      %s90 = sphi 0, %s87
      %s91 = sphi 0, %s90
      %s107 = sphi 0, %s91
      %s113 = sphi 0, %s115
      %s116 = sphi 0, %s113
      %s117 = sphi 0, %s116
      %s133 = sphi 0, %s117
      %s139 = sphi 0, %s141
      %s142 = sphi 0, %s139
      %s143 = sphi 0, %s142
      %s159 = sphi 0, %s143
      %s165 = sphi 0, %s167
      %s168 = sphi 0, %s165
      %s169 = sphi 0, %s168
      %s185 = sphi 0, %s169
      %s191 = sphi 0, %s193
      %s194 = sphi 0, %s191
      %s195 = sphi 0, %s194
      %s211 = sphi 0, %s195
      %s217 = sphi 0, %s219
      %s220 = sphi 0, %s217
      %s221 = sphi 0, %s220
      %s237 = sphi 0, %s221
      %s243 = sphi 0, %s245
      %s246 = sphi 0, %s243
      %s247 = sphi 0, %s246
      %s263 = sphi 0, %s247
      %s269 = sphi 0, %s271
      %s272 = sphi 0, %s269
      %s273 = sphi 0, %s272
      %s289 = sphi 0, %s273
      %s295 = sphi 0, %s297
      %s298 = sphi 0, %s295
      %s299 = sphi 0, %s298
      %s315 = sphi 0, %s299
      %s321 = sphi 0, %s323
      %s324 = sphi 0, %s321
      %s325 = sphi 0, %s324
      %s341 = sphi 0, %s325
      %s347 = sphi 0, %s349
      %s350 = sphi 0, %s347
      %s351 = sphi 0, %s350
      %s367 = sphi 0, %s351
      %s373 = sphi 0, %s375
      %s376 = sphi 0, %s373
      %s377 = sphi 0, %s376
      %s393 = sphi 0, %s377
      %s399 = sphi 0, %s401
      %s402 = sphi 0, %s399
      %s403 = sphi 0, %s402
      %s419 = sphi 0, %s403
      %s425 = sphi 0, %s427
      %s428 = sphi 0, %s425
      %s429 = sphi 0, %s428
      %s445 = sphi 0, %s429
      %s451 = sphi 0, %s453
      %s454 = sphi 0, %s451
      %s455 = sphi 0, %s454
      %s471 = sphi 0, %s455
      %s477 = sphi 0, %s479
      %s480 = sphi 0, %s477
      %s481 = sphi 0, %s480
      %s497 = sphi 0, %s481
      %s503 = sphi 0, %s505
      %s506 = sphi 0, %s503
      %s507 = sphi 0, %s506
      %s523 = sphi 0, %s507
      %s529 = sphi 0, %s531
      %s532 = sphi 0, %s529
      %s533 = sphi 0, %s532
      %s549 = sphi 0, %s533
    $region4: #{tpu_custom_call.1} parent=1 // loop_header_branch
      %42 = sbr.rel (%p40) target = $region8
    $region5: #{tpu_custom_call.1} parent=1 // loop_body
      %s44 = ssub.s32 %s39, 1
      %s45 = ssub.s32 %s39, 2
      %s52 = sadd.s32 1, %s47
      %p53 = scmp.ge.s32.totalorder %s52, 2
      %s54 = scalar_select %p53, 0, %s52
      %s55 = sadd.s32 1, %s46
      %s56 = scalar_select %p53, %s55, %s46
      %p57 = scmp.ge.s32.totalorder %s56, 2
      %s58 = scalar_select %p57, 0, %s56
      %s59 = ssub.s32 %s46, %s58
      %p60 = scmp.eq.s32.totalorder %s59, 0
      %s62 = sadd.s32 %s61, 1
      %s63 = scalar_select %p60, %s61, %s62
      %p66 = pneg %p60
      %p67 = scmp.eq.s32.totalorder %s39, 3
      %p68 = por %p66, %p67
      %p69 = scmp.ne.s32.totalorder %s61, %s64
      %p70 = scmp.eq.s32.totalorder %s39, 0
      %p71 = por %p69, %p70
      %p72 = scmp.ne.s32.totalorder %s61, %s64
      %p73 = scmp.eq.s32.totalorder %s44, 3
      %p74 = por %p72, %p73
      %p75 = scmp.ne.s32.totalorder %s64, %s65
      %p76 = scmp.eq.s32.totalorder %s44, 0
      %p77 = por %p75, %p76
      %p78 = scmp.ne.s32.totalorder %s64, %s65
      %p79 = scmp.eq.s32.totalorder %s45, 3
      %p80 = por %p78, %p79
      %p82 = scmp.ne.s32.totalorder %s65, %s81
      %p83 = scmp.eq.s32.totalorder %s45, 0
      %p84 = por %p82, %p83
      %s85 = ssub.s32 %s46, %s58
      %p86 = scmp.eq.s32.totalorder %s85, 0
      %s88 = sadd.s32 %s87, 1
      %s89 = scalar_select %p86, %s87, %s88
      %p92 = pneg %p86
      %p93 = scmp.eq.s32.totalorder %s39, 3
      %p94 = por %p92, %p93
      %p95 = scmp.ne.s32.totalorder %s87, %s90
      %p96 = scmp.eq.s32.totalorder %s39, 0
      %p97 = por %p95, %p96
      %p98 = scmp.ne.s32.totalorder %s87, %s90
      %p99 = scmp.eq.s32.totalorder %s44, 3
      %p100 = por %p98, %p99
      %p101 = scmp.ne.s32.totalorder %s90, %s91
      %p102 = scmp.eq.s32.totalorder %s44, 0
      %p103 = por %p101, %p102
      %p104 = scmp.ne.s32.totalorder %s90, %s91
      %p105 = scmp.eq.s32.totalorder %s45, 3
      %p106 = por %p104, %p105
      %p108 = scmp.ne.s32.totalorder %s91, %s107
      %p109 = scmp.eq.s32.totalorder %s45, 0
      %p110 = por %p108, %p109
      %s111 = ssub.s32 %s47, %s54
      %p112 = scmp.eq.s32.totalorder %s111, 0
      %s114 = sadd.s32 %s113, 1
      %s115 = scalar_select %p112, %s113, %s114
      %p118 = pneg %p112
      %p119 = scmp.eq.s32.totalorder %s39, 3
      %p120 = por %p118, %p119
      %p121 = scmp.ne.s32.totalorder %s113, %s116
      %p122 = scmp.eq.s32.totalorder %s39, 0
      %p123 = por %p121, %p122
      %p124 = scmp.ne.s32.totalorder %s113, %s116
      %p125 = scmp.eq.s32.totalorder %s44, 3
      %p126 = por %p124, %p125
      %p127 = scmp.ne.s32.totalorder %s116, %s117
      %p128 = scmp.eq.s32.totalorder %s44, 0
      %p129 = por %p127, %p128
      %p130 = scmp.ne.s32.totalorder %s116, %s117
      %p131 = scmp.eq.s32.totalorder %s45, 3
      %p132 = por %p130, %p131
      %p134 = scmp.ne.s32.totalorder %s117, %s133
      %p135 = scmp.eq.s32.totalorder %s45, 0
      %p136 = por %p134, %p135
      %s137 = ssub.s32 %s47, %s54
      %p138 = scmp.eq.s32.totalorder %s137, 0
      %s140 = sadd.s32 %s139, 1
      %s141 = scalar_select %p138, %s139, %s140
      %p144 = pneg %p138
      %p145 = scmp.eq.s32.totalorder %s39, 3
      %p146 = por %p144, %p145
      %p147 = scmp.ne.s32.totalorder %s139, %s142
      %p148 = scmp.eq.s32.totalorder %s39, 0
      %p149 = por %p147, %p148
      %p150 = scmp.ne.s32.totalorder %s139, %s142
      %p151 = scmp.eq.s32.totalorder %s44, 3
      %p152 = por %p150, %p151
      %p153 = scmp.ne.s32.totalorder %s142, %s143
      %p154 = scmp.eq.s32.totalorder %s44, 0
      %p155 = por %p153, %p154
      %p156 = scmp.ne.s32.totalorder %s142, %s143
      %p157 = scmp.eq.s32.totalorder %s45, 3
      %p158 = por %p156, %p157
      %p160 = scmp.ne.s32.totalorder %s143, %s159
      %p161 = scmp.eq.s32.totalorder %s45, 0
      %p162 = por %p160, %p161
      %s163 = ssub.s32 %s47, %s54
      %p164 = scmp.eq.s32.totalorder %s163, 0
      %s166 = sadd.s32 %s165, 1
      %s167 = scalar_select %p164, %s165, %s166
      %p170 = pneg %p164
      %p171 = scmp.eq.s32.totalorder %s39, 3
      %p172 = por %p170, %p171
      %p173 = scmp.ne.s32.totalorder %s165, %s168
      %p174 = scmp.eq.s32.totalorder %s39, 0
      %p175 = por %p173, %p174
      %p176 = scmp.ne.s32.totalorder %s165, %s168
      %p177 = scmp.eq.s32.totalorder %s44, 3
      %p178 = por %p176, %p177
      %p179 = scmp.ne.s32.totalorder %s168, %s169
      %p180 = scmp.eq.s32.totalorder %s44, 0
      %p181 = por %p179, %p180
      %p182 = scmp.ne.s32.totalorder %s168, %s169
      %p183 = scmp.eq.s32.totalorder %s45, 3
      %p184 = por %p182, %p183
      %p186 = scmp.ne.s32.totalorder %s169, %s185
      %p187 = scmp.eq.s32.totalorder %s45, 0
      %p188 = por %p186, %p187
      %s189 = ssub.s32 %s47, %s54
      %p190 = scmp.eq.s32.totalorder %s189, 0
      %s192 = sadd.s32 %s191, 1
      %s193 = scalar_select %p190, %s191, %s192
      %p196 = pneg %p190
      %p197 = scmp.eq.s32.totalorder %s39, 3
      %p198 = por %p196, %p197
      %p199 = scmp.ne.s32.totalorder %s191, %s194
      %p200 = scmp.eq.s32.totalorder %s39, 0
      %p201 = por %p199, %p200
      %p202 = scmp.ne.s32.totalorder %s191, %s194
      %p203 = scmp.eq.s32.totalorder %s44, 3
      %p204 = por %p202, %p203
      %p205 = scmp.ne.s32.totalorder %s194, %s195
      %p206 = scmp.eq.s32.totalorder %s44, 0
      %p207 = por %p205, %p206
      %p208 = scmp.ne.s32.totalorder %s194, %s195
      %p209 = scmp.eq.s32.totalorder %s45, 3
      %p210 = por %p208, %p209
      %p212 = scmp.ne.s32.totalorder %s195, %s211
      %p213 = scmp.eq.s32.totalorder %s45, 0
      %p214 = por %p212, %p213
      %s215 = ssub.s32 %s47, %s54
      %p216 = scmp.eq.s32.totalorder %s215, 0
      %s218 = sadd.s32 %s217, 1
      %s219 = scalar_select %p216, %s217, %s218
      %p222 = pneg %p216
      %p223 = scmp.eq.s32.totalorder %s39, 3
      %p224 = por %p222, %p223
      %p225 = scmp.ne.s32.totalorder %s217, %s220
      %p226 = scmp.eq.s32.totalorder %s39, 0
      %p227 = por %p225, %p226
      %p228 = scmp.ne.s32.totalorder %s217, %s220
      %p229 = scmp.eq.s32.totalorder %s44, 3
      %p230 = por %p228, %p229
      %p231 = scmp.ne.s32.totalorder %s220, %s221
      %p232 = scmp.eq.s32.totalorder %s44, 0
      %p233 = por %p231, %p232
      %p234 = scmp.ne.s32.totalorder %s220, %s221
      %p235 = scmp.eq.s32.totalorder %s45, 3
      %p236 = por %p234, %p235
      %p238 = scmp.ne.s32.totalorder %s221, %s237
      %p239 = scmp.eq.s32.totalorder %s45, 0
      %p240 = por %p238, %p239
      %s241 = ssub.s32 %s47, %s54
      %p242 = scmp.eq.s32.totalorder %s241, 0
      %s244 = sadd.s32 %s243, 1
      %s245 = scalar_select %p242, %s243, %s244
      %p248 = pneg %p242
      %p249 = scmp.eq.s32.totalorder %s39, 3
      %p250 = por %p248, %p249
      %p251 = scmp.ne.s32.totalorder %s243, %s246
      %p252 = scmp.eq.s32.totalorder %s39, 0
      %p253 = por %p251, %p252
      %p254 = scmp.ne.s32.totalorder %s243, %s246
      %p255 = scmp.eq.s32.totalorder %s44, 3
      %p256 = por %p254, %p255
      %p257 = scmp.ne.s32.totalorder %s246, %s247
      %p258 = scmp.eq.s32.totalorder %s44, 0
      %p259 = por %p257, %p258
      %p260 = scmp.ne.s32.totalorder %s246, %s247
      %p261 = scmp.eq.s32.totalorder %s45, 3
      %p262 = por %p260, %p261
      %p264 = scmp.ne.s32.totalorder %s247, %s263
      %p265 = scmp.eq.s32.totalorder %s45, 0
      %p266 = por %p264, %p265
      %s267 = ssub.s32 %s47, %s54
      %p268 = scmp.eq.s32.totalorder %s267, 0
      %s270 = sadd.s32 %s269, 1
      %s271 = scalar_select %p268, %s269, %s270
      %p274 = pneg %p268
      %p275 = scmp.eq.s32.totalorder %s39, 3
      %p276 = por %p274, %p275
      %p277 = scmp.ne.s32.totalorder %s269, %s272
      %p278 = scmp.eq.s32.totalorder %s39, 0
      %p279 = por %p277, %p278
      %p280 = scmp.ne.s32.totalorder %s269, %s272
      %p281 = scmp.eq.s32.totalorder %s44, 3
      %p282 = por %p280, %p281
      %p283 = scmp.ne.s32.totalorder %s272, %s273
      %p284 = scmp.eq.s32.totalorder %s44, 0
      %p285 = por %p283, %p284
      %p286 = scmp.ne.s32.totalorder %s272, %s273
      %p287 = scmp.eq.s32.totalorder %s45, 3
      %p288 = por %p286, %p287
      %p290 = scmp.ne.s32.totalorder %s273, %s289
      %p291 = scmp.eq.s32.totalorder %s45, 0
      %p292 = por %p290, %p291
      %s293 = ssub.s32 %s47, %s54
      %p294 = scmp.eq.s32.totalorder %s293, 0
      %s296 = sadd.s32 %s295, 1
      %s297 = scalar_select %p294, %s295, %s296
      %p300 = pneg %p294
      %p301 = scmp.eq.s32.totalorder %s39, 3
      %p302 = por %p300, %p301
      %p303 = scmp.ne.s32.totalorder %s295, %s298
      %p304 = scmp.eq.s32.totalorder %s39, 0
      %p305 = por %p303, %p304
      %p306 = scmp.ne.s32.totalorder %s295, %s298
      %p307 = scmp.eq.s32.totalorder %s44, 3
      %p308 = por %p306, %p307
      %p309 = scmp.ne.s32.totalorder %s298, %s299
      %p310 = scmp.eq.s32.totalorder %s44, 0
      %p311 = por %p309, %p310
      %p312 = scmp.ne.s32.totalorder %s298, %s299
      %p313 = scmp.eq.s32.totalorder %s45, 3
      %p314 = por %p312, %p313
      %p316 = scmp.ne.s32.totalorder %s299, %s315
      %p317 = scmp.eq.s32.totalorder %s45, 0
      %p318 = por %p316, %p317
      %s319 = ssub.s32 %s47, %s54
      %p320 = scmp.eq.s32.totalorder %s319, 0
      %s322 = sadd.s32 %s321, 1
      %s323 = scalar_select %p320, %s321, %s322
      %p326 = pneg %p320
      %p327 = scmp.eq.s32.totalorder %s39, 3
      %p328 = por %p326, %p327
      %p329 = scmp.ne.s32.totalorder %s321, %s324
      %p330 = scmp.eq.s32.totalorder %s39, 0
      %p331 = por %p329, %p330
      %p332 = scmp.ne.s32.totalorder %s321, %s324
      %p333 = scmp.eq.s32.totalorder %s44, 3
      %p334 = por %p332, %p333
      %p335 = scmp.ne.s32.totalorder %s324, %s325
      %p336 = scmp.eq.s32.totalorder %s44, 0
      %p337 = por %p335, %p336
      %p338 = scmp.ne.s32.totalorder %s324, %s325
      %p339 = scmp.eq.s32.totalorder %s45, 3
      %p340 = por %p338, %p339
      %p342 = scmp.ne.s32.totalorder %s325, %s341
      %p343 = scmp.eq.s32.totalorder %s45, 0
      %p344 = por %p342, %p343
      %s345 = ssub.s32 %s47, %s54
      %p346 = scmp.eq.s32.totalorder %s345, 0
      %s348 = sadd.s32 %s347, 1
      %s349 = scalar_select %p346, %s347, %s348
      %p352 = pneg %p346
      %p353 = scmp.eq.s32.totalorder %s39, 3
      %p354 = por %p352, %p353
      %p355 = scmp.ne.s32.totalorder %s347, %s350
      %p356 = scmp.eq.s32.totalorder %s39, 0
      %p357 = por %p355, %p356
      %p358 = scmp.ne.s32.totalorder %s347, %s350
      %p359 = scmp.eq.s32.totalorder %s44, 3
      %p360 = por %p358, %p359
      %p361 = scmp.ne.s32.totalorder %s350, %s351
      %p362 = scmp.eq.s32.totalorder %s44, 0
      %p363 = por %p361, %p362
      %p364 = scmp.ne.s32.totalorder %s350, %s351
      %p365 = scmp.eq.s32.totalorder %s45, 3
      %p366 = por %p364, %p365
      %p368 = scmp.ne.s32.totalorder %s351, %s367
      %p369 = scmp.eq.s32.totalorder %s45, 0
      %p370 = por %p368, %p369
      %s371 = ssub.s32 %s47, %s54
      %p372 = scmp.eq.s32.totalorder %s371, 0
      %s374 = sadd.s32 %s373, 1
      %s375 = scalar_select %p372, %s373, %s374
      %p378 = pneg %p372
      %p379 = scmp.eq.s32.totalorder %s39, 3
      %p380 = por %p378, %p379
      %p381 = scmp.ne.s32.totalorder %s373, %s376
      %p382 = scmp.eq.s32.totalorder %s39, 0
      %p383 = por %p381, %p382
      %p384 = scmp.ne.s32.totalorder %s373, %s376
      %p385 = scmp.eq.s32.totalorder %s44, 3
      %p386 = por %p384, %p385
      %p387 = scmp.ne.s32.totalorder %s376, %s377
      %p388 = scmp.eq.s32.totalorder %s44, 0
      %p389 = por %p387, %p388
      %p390 = scmp.ne.s32.totalorder %s376, %s377
      %p391 = scmp.eq.s32.totalorder %s45, 3
      %p392 = por %p390, %p391
      %p394 = scmp.ne.s32.totalorder %s377, %s393
      %p395 = scmp.eq.s32.totalorder %s45, 0
      %p396 = por %p394, %p395
      %s397 = ssub.s32 %s47, %s54
      %p398 = scmp.eq.s32.totalorder %s397, 0
      %s400 = sadd.s32 %s399, 1
      %s401 = scalar_select %p398, %s399, %s400
      %p404 = pneg %p398
      %p405 = scmp.eq.s32.totalorder %s39, 3
      %p406 = por %p404, %p405
      %p407 = scmp.ne.s32.totalorder %s399, %s402
      %p408 = scmp.eq.s32.totalorder %s39, 0
      %p409 = por %p407, %p408
      %p410 = scmp.ne.s32.totalorder %s399, %s402
      %p411 = scmp.eq.s32.totalorder %s44, 3
      %p412 = por %p410, %p411
      %p413 = scmp.ne.s32.totalorder %s402, %s403
      %p414 = scmp.eq.s32.totalorder %s44, 0
      %p415 = por %p413, %p414
      %p416 = scmp.ne.s32.totalorder %s402, %s403
      %p417 = scmp.eq.s32.totalorder %s45, 3
      %p418 = por %p416, %p417
      %p420 = scmp.ne.s32.totalorder %s403, %s419
      %p421 = scmp.eq.s32.totalorder %s45, 0
      %p422 = por %p420, %p421
      %s423 = ssub.s32 %s47, %s54
      %p424 = scmp.eq.s32.totalorder %s423, 0
      %s426 = sadd.s32 %s425, 1
      %s427 = scalar_select %p424, %s425, %s426
      %p430 = pneg %p424
      %p431 = scmp.eq.s32.totalorder %s39, 3
      %p432 = por %p430, %p431
      %p433 = scmp.ne.s32.totalorder %s425, %s428
      %p434 = scmp.eq.s32.totalorder %s39, 0
      %p435 = por %p433, %p434
      %p436 = scmp.ne.s32.totalorder %s425, %s428
      %p437 = scmp.eq.s32.totalorder %s44, 3
      %p438 = por %p436, %p437
      %p439 = scmp.ne.s32.totalorder %s428, %s429
      %p440 = scmp.eq.s32.totalorder %s44, 0
      %p441 = por %p439, %p440
      %p442 = scmp.ne.s32.totalorder %s428, %s429
      %p443 = scmp.eq.s32.totalorder %s45, 3
      %p444 = por %p442, %p443
      %p446 = scmp.ne.s32.totalorder %s429, %s445
      %p447 = scmp.eq.s32.totalorder %s45, 0
      %p448 = por %p446, %p447
      %s449 = ssub.s32 %s47, %s54
      %p450 = scmp.eq.s32.totalorder %s449, 0
      %s452 = sadd.s32 %s451, 1
      %s453 = scalar_select %p450, %s451, %s452
      %p456 = pneg %p450
      %p457 = scmp.eq.s32.totalorder %s39, 3
      %p458 = por %p456, %p457
      %p459 = scmp.ne.s32.totalorder %s451, %s454
      %p460 = scmp.eq.s32.totalorder %s39, 0
      %p461 = por %p459, %p460
      %p462 = scmp.ne.s32.totalorder %s451, %s454
      %p463 = scmp.eq.s32.totalorder %s44, 3
      %p464 = por %p462, %p463
      %p465 = scmp.ne.s32.totalorder %s454, %s455
      %p466 = scmp.eq.s32.totalorder %s44, 0
      %p467 = por %p465, %p466
      %p468 = scmp.ne.s32.totalorder %s454, %s455
      %p469 = scmp.eq.s32.totalorder %s45, 3
      %p470 = por %p468, %p469
      %p472 = scmp.ne.s32.totalorder %s455, %s471
      %p473 = scmp.eq.s32.totalorder %s45, 0
      %p474 = por %p472, %p473
      %s475 = ssub.s32 %s47, %s54
      %p476 = scmp.eq.s32.totalorder %s475, 0
      %s478 = sadd.s32 %s477, 1
      %s479 = scalar_select %p476, %s477, %s478
      %p482 = pneg %p476
      %p483 = scmp.eq.s32.totalorder %s39, 3
      %p484 = por %p482, %p483
      %p485 = scmp.ne.s32.totalorder %s477, %s480
      %p486 = scmp.eq.s32.totalorder %s39, 0
      %p487 = por %p485, %p486
      %p488 = scmp.ne.s32.totalorder %s477, %s480
      %p489 = scmp.eq.s32.totalorder %s44, 3
      %p490 = por %p488, %p489
      %p491 = scmp.ne.s32.totalorder %s480, %s481
      %p492 = scmp.eq.s32.totalorder %s44, 0
      %p493 = por %p491, %p492
      %p494 = scmp.ne.s32.totalorder %s480, %s481
      %p495 = scmp.eq.s32.totalorder %s45, 3
      %p496 = por %p494, %p495
      %p498 = scmp.ne.s32.totalorder %s481, %s497
      %p499 = scmp.eq.s32.totalorder %s45, 0
      %p500 = por %p498, %p499
      %s501 = ssub.s32 %s47, %s54
      %p502 = scmp.eq.s32.totalorder %s501, 0
      %s504 = sadd.s32 %s503, 1
      %s505 = scalar_select %p502, %s503, %s504
      %p508 = pneg %p502
      %p509 = scmp.eq.s32.totalorder %s39, 3
      %p510 = por %p508, %p509
      %p511 = scmp.ne.s32.totalorder %s503, %s506
      %p512 = scmp.eq.s32.totalorder %s39, 0
      %p513 = por %p511, %p512
      %p514 = scmp.ne.s32.totalorder %s503, %s506
      %p515 = scmp.eq.s32.totalorder %s44, 3
      %p516 = por %p514, %p515
      %p517 = scmp.ne.s32.totalorder %s506, %s507
      %p518 = scmp.eq.s32.totalorder %s44, 0
      %p519 = por %p517, %p518
      %p520 = scmp.ne.s32.totalorder %s506, %s507
      %p521 = scmp.eq.s32.totalorder %s45, 3
      %p522 = por %p520, %p521
      %p524 = scmp.ne.s32.totalorder %s507, %s523
      %p525 = scmp.eq.s32.totalorder %s45, 0
      %p526 = por %p524, %p525
      %s527 = ssub.s32 %s46, %s58
      %p528 = scmp.eq.s32.totalorder %s527, 0
      %s530 = sadd.s32 %s529, 1
      %s531 = scalar_select %p528, %s529, %s530
      %p534 = pneg %p528
      %p535 = scmp.eq.s32.totalorder %s39, 3
      %p536 = por %p534, %p535
      %p537 = scmp.ne.s32.totalorder %s529, %s532
      %p538 = scmp.eq.s32.totalorder %s39, 0
      %p539 = por %p537, %p538
      %p540 = scmp.ne.s32.totalorder %s529, %s532
      %p541 = scmp.eq.s32.totalorder %s44, 3
      %p542 = por %p540, %p541
      %p543 = scmp.ne.s32.totalorder %s532, %s533
      %p544 = scmp.eq.s32.totalorder %s44, 0
      %p545 = por %p543, %p544
      %p546 = scmp.ne.s32.totalorder %s532, %s533
      %p547 = scmp.eq.s32.totalorder %s45, 3
      %p548 = por %p546, %p547
      %p550 = scmp.ne.s32.totalorder %s533, %s549
      %p551 = scmp.eq.s32.totalorder %s45, 0
      %p552 = por %p550, %p551
      %p553 = scmp.le.s32.totalorder 1, %s39
      %p554 = scmp.lt.s32.totalorder %s39, 5
      %p555 = pnand %p553, %p554
      %p556 = pneg %p555
      // Predicated region
      $region9: #{tpu_custom_call.1} parent=5 // pred_check
        _
      $region10: #{tpu_custom_call.1} parent=5 // pred_check_branch
        %558 = sbr.rel (%p555) target = $region12
      $region11: #{tpu_custom_call.1} parent=5 // pred_region
        %s559 = ssub.s32 %s39, 1
      $region12: #{tpu_custom_call.1} parent=5 // pred_fallthru
        _
      %p560 = scmp.lt.s32.totalorder %s39, 4
      // Predicated region
      $region13: #{tpu_custom_call.1} parent=5 // pred_check
        %p561 = pneg %p560
      $region14: #{tpu_custom_call.1} parent=5 // pred_check_branch
        %563 = sbr.rel (%p561) target = $region16
      $region15: #{tpu_custom_call.1} parent=5 // pred_region
        // Predicated region
        $region17: #{tpu_custom_call.1} parent=15 // pred_check
          %p564 = pneg %p71
        $region18: #{tpu_custom_call.1} parent=15 // pred_check_branch
          %566 = sbr.rel (%p564) target = $region20
        $region19: #{tpu_custom_call.1} parent=15 // pred_region
          %s567 = sand.u32 %s61, 1
          %s568 = scalar_lea.sflag [#allocation3], %s567
          %s569 = sand.u32 %s61, 1
          %s570 = smul.addr %s569, 8
          %s571 = scalar_lea.vmem [#allocation2], %s570
          %573 = vsyncadd %s568, 0
          %s574 = smul.addr %s46, 8
          %s575 = scalar_lea.hbm %s0, %s574
          %s577 = sshll.u32 %s575, 4
          %s578 = int_to_ptr.hbm [resolvable:$true] %s577
          %s579 = sshll.u32 %s571, 4
          %s580 = int_to_ptr.vmem [resolvable:$true] %s579
          %582 = dma.hbm_to_vmem [thread:$0]  %s578, 128, %s580, %s568
        $region20: #{tpu_custom_call.1} parent=15 // pred_fallthru
          _
        // Predicated region
        $region21: #{tpu_custom_call.1} parent=15 // pred_check
          %p583 = pneg %p97
        $region22: #{tpu_custom_call.1} parent=15 // pred_check_branch
          %585 = sbr.rel (%p583) target = $region24
        $region23: #{tpu_custom_call.1} parent=15 // pred_region
          %s586 = sand.u32 %s39, 1
          %s587 = scalar_lea.sflag [#allocation6], %s586
          %s588 = sand.u32 %s87, 1
          %s589 = scalar_lea.vmem [#allocation5], %s588
          %591 = vsyncadd %s587, 0
          %s592 = scalar_lea.hbm %s1, %s46
          %s594 = sshll.u32 %s592, 4
          %s595 = int_to_ptr.hbm [resolvable:$true] %s594
          %s596 = sshll.u32 %s589, 4
          %s597 = int_to_ptr.vmem [resolvable:$true] %s596
          %599 = dma.hbm_to_vmem [thread:$0]  %s595, 16, %s597, %s587
        $region24: #{tpu_custom_call.1} parent=15 // pred_fallthru
          _
        // Predicated region
        $region25: #{tpu_custom_call.1} parent=15 // pred_check
          %p600 = pneg %p123
        $region26: #{tpu_custom_call.1} parent=15 // pred_check_branch
          %602 = sbr.rel (%p600) target = $region28
        $region27: #{tpu_custom_call.1} parent=15 // pred_region
          %p603 = scmp.lt.s32.totalorder %s47, 1
          %s604 = scalar_select %p603, %s47, 1
          %s605 = smul.addr %s604, 4
          %s606 = smul.addr %s605, 4
          %s607 = scalar_lea.vmem %s2, %s606
        $region28: #{tpu_custom_call.1} parent=15 // pred_fallthru
          _
        // Predicated region
        $region29: #{tpu_custom_call.1} parent=15 // pred_check
          %p608 = pneg %p149
        $region30: #{tpu_custom_call.1} parent=15 // pred_check_branch
          %610 = sbr.rel (%p608) target = $region32
        $region31: #{tpu_custom_call.1} parent=15 // pred_region
          %s611 = sand.u32 %s39, 1
          %s612 = scalar_lea.sflag [#allocation6], %s611
          %s613 = sand.u32 %s139, 1
          %s614 = scalar_lea.vmem [#allocation7], %s613
          %616 = vsyncadd %s612, 0
          %s617 = scalar_lea.hbm %s3, %s47
          %s619 = sshll.u32 %s617, 4
          %s620 = int_to_ptr.hbm [resolvable:$true] %s619
          %s621 = sshll.u32 %s614, 4
          %s622 = int_to_ptr.vmem [resolvable:$true] %s621
          %624 = dma.hbm_to_vmem [thread:$0]  %s620, 16, %s622, %s612
        $region32: #{tpu_custom_call.1} parent=15 // pred_fallthru
          _
        // Predicated region
        $region33: #{tpu_custom_call.1} parent=15 // pred_check
          %p625 = pneg %p175
        $region34: #{tpu_custom_call.1} parent=15 // pred_check_branch
          %627 = sbr.rel (%p625) target = $region36
        $region35: #{tpu_custom_call.1} parent=15 // pred_region
          %p628 = scmp.lt.s32.totalorder %s47, 1
          %s629 = scalar_select %p628, %s47, 1
          %s630 = smul.addr %s629, 4
          %s631 = smul.addr %s630, 4
          %s632 = scalar_lea.vmem %s4, %s631
        $region36: #{tpu_custom_call.1} parent=15 // pred_fallthru
          _
        // Predicated region
        $region37: #{tpu_custom_call.1} parent=15 // pred_check
          %p633 = pneg %p201
        $region38: #{tpu_custom_call.1} parent=15 // pred_check_branch
          %635 = sbr.rel (%p633) target = $region40
        $region39: #{tpu_custom_call.1} parent=15 // pred_region
          %p636 = scmp.lt.s32.totalorder %s47, 1
          %s637 = scalar_select %p636, %s47, 1
          %s638 = scalar_lea.vmem %s5, %s637
        $region40: #{tpu_custom_call.1} parent=15 // pred_fallthru
          _
        // Predicated region
        $region41: #{tpu_custom_call.1} parent=15 // pred_check
          %p639 = pneg %p227
        $region42: #{tpu_custom_call.1} parent=15 // pred_check_branch
          %641 = sbr.rel (%p639) target = $region44
        $region43: #{tpu_custom_call.1} parent=15 // pred_region
          %p642 = scmp.lt.s32.totalorder %s47, 1
          %s643 = scalar_select %p642, %s47, 1
          %s644 = smul.addr %s643, 4
          %s645 = smul.addr %s644, 4
          %s646 = scalar_lea.vmem %s6, %s645
        $region44: #{tpu_custom_call.1} parent=15 // pred_fallthru
          _
        // Predicated region
        $region45: #{tpu_custom_call.1} parent=15 // pred_check
          %p647 = pneg %p253
        $region46: #{tpu_custom_call.1} parent=15 // pred_check_branch
          %649 = sbr.rel (%p647) target = $region48
        $region47: #{tpu_custom_call.1} parent=15 // pred_region
          %p650 = scmp.lt.s32.totalorder %s47, 1
          %s651 = scalar_select %p650, %s47, 1
          %s652 = scalar_lea.vmem %s7, %s651
        $region48: #{tpu_custom_call.1} parent=15 // pred_fallthru
          _
        // Predicated region
        $region49: #{tpu_custom_call.1} parent=15 // pred_check
          %p653 = pneg %p279
        $region50: #{tpu_custom_call.1} parent=15 // pred_check_branch
          %655 = sbr.rel (%p653) target = $region52
        $region51: #{tpu_custom_call.1} parent=15 // pred_region
          %s656 = sand.u32 %s39, 1
          %s657 = scalar_lea.sflag [#allocation9], %s656
          %s658 = sand.u32 %s269, 1
          %s659 = smul.addr %s658, 16
          %s660 = scalar_lea.vmem [#allocation8], %s659
          %662 = vsyncadd %s657, 0
          %s663 = smul.addr %s47, 4
          %s664 = smul.addr %s663, 4
          %s665 = scalar_lea.hbm %s8, %s664
          %s666 = sshll.u32 %s665, 4
          %s667 = int_to_ptr.hbm [resolvable:$true] %s666
          %s668 = sshll.u32 %s660, 4
          %s669 = int_to_ptr.vmem [resolvable:$true] %s668
          %674 = dma.hbm_to_vmem [thread:$0]  %s667, 256, %s669, %s657, 64, 64, 4
        $region52: #{tpu_custom_call.1} parent=15 // pred_fallthru
          _
        // Predicated region
        $region53: #{tpu_custom_call.1} parent=15 // pred_check
          %p675 = pneg %p305
        $region54: #{tpu_custom_call.1} parent=15 // pred_check_branch
          %677 = sbr.rel (%p675) target = $region56
        $region55: #{tpu_custom_call.1} parent=15 // pred_region
          %p678 = scmp.lt.s32.totalorder %s47, 1
          %s679 = scalar_select %p678, %s47, 1
          %s680 = scalar_lea.vmem %s9, %s679
        $region56: #{tpu_custom_call.1} parent=15 // pred_fallthru
          _
        // Predicated region
        $region57: #{tpu_custom_call.1} parent=15 // pred_check
          %p681 = pneg %p331
        $region58: #{tpu_custom_call.1} parent=15 // pred_check_branch
          %683 = sbr.rel (%p681) target = $region60
        $region59: #{tpu_custom_call.1} parent=15 // pred_region
          %p684 = scmp.lt.s32.totalorder %s47, 1
          %s685 = scalar_select %p684, %s47, 1
          %s686 = scalar_lea.vmem %s10, %s685
        $region60: #{tpu_custom_call.1} parent=15 // pred_fallthru
          _
        // Predicated region
        $region61: #{tpu_custom_call.1} parent=15 // pred_check
          %p687 = pneg %p357
        $region62: #{tpu_custom_call.1} parent=15 // pred_check_branch
          %689 = sbr.rel (%p687) target = $region64
        $region63: #{tpu_custom_call.1} parent=15 // pred_region
          %s690 = sand.u32 %s39, 1
          %s691 = scalar_lea.sflag [#allocation9], %s690
          %s692 = sand.u32 %s347, 1
          %s693 = scalar_lea.vmem [#allocation10], %s692
          %695 = vsyncadd %s691, 0
          %s696 = scalar_lea.hbm %s11, %s47
          %s698 = sshll.u32 %s696, 4
          %s699 = int_to_ptr.hbm [resolvable:$true] %s698
          %s700 = sshll.u32 %s693, 4
          %s701 = int_to_ptr.vmem [resolvable:$true] %s700
          %703 = dma.hbm_to_vmem [thread:$0]  %s699, 16, %s701, %s691
        $region64: #{tpu_custom_call.1} parent=15 // pred_fallthru
          _
        // Predicated region
        $region65: #{tpu_custom_call.1} parent=15 // pred_check
          %p704 = pneg %p383
        $region66: #{tpu_custom_call.1} parent=15 // pred_check_branch
          %706 = sbr.rel (%p704) target = $region68
        $region67: #{tpu_custom_call.1} parent=15 // pred_region
          %s707 = sand.u32 %s39, 1
          %s708 = scalar_lea.sflag [#allocation12], %s707
          %s709 = sand.u32 %s373, 1
          %s710 = smul.addr %s709, 16
          %s711 = scalar_lea.vmem [#allocation11], %s710
          %713 = vsyncadd %s708, 0
          %s714 = smul.addr %s47, 4
          %s715 = smul.addr %s714, 4
          %s716 = scalar_lea.hbm %s12, %s715
          %s717 = sshll.u32 %s716, 4
          %s718 = int_to_ptr.hbm [resolvable:$true] %s717
          %s719 = sshll.u32 %s711, 4
          %s720 = int_to_ptr.vmem [resolvable:$true] %s719
          %725 = dma.hbm_to_vmem [thread:$0]  %s718, 256, %s720, %s708, 64, 64, 4
        $region68: #{tpu_custom_call.1} parent=15 // pred_fallthru
          _
        // Predicated region
        $region69: #{tpu_custom_call.1} parent=15 // pred_check
          %p726 = pneg %p409
        $region70: #{tpu_custom_call.1} parent=15 // pred_check_branch
          %728 = sbr.rel (%p726) target = $region72
        $region71: #{tpu_custom_call.1} parent=15 // pred_region
          %p729 = scmp.lt.s32.totalorder %s47, 1
          %s730 = scalar_select %p729, %s47, 1
          %s731 = scalar_lea.vmem %s13, %s730
        $region72: #{tpu_custom_call.1} parent=15 // pred_fallthru
          _
        // Predicated region
        $region73: #{tpu_custom_call.1} parent=15 // pred_check
          %p732 = pneg %p435
        $region74: #{tpu_custom_call.1} parent=15 // pred_check_branch
          %734 = sbr.rel (%p732) target = $region76
        $region75: #{tpu_custom_call.1} parent=15 // pred_region
          %p735 = scmp.lt.s32.totalorder %s47, 1
          %s736 = scalar_select %p735, %s47, 1
          %s737 = smul.addr %s736, 8
          %s738 = smul.addr %s737, 4
          %s739 = scalar_lea.vmem %s14, %s738
        $region76: #{tpu_custom_call.1} parent=15 // pred_fallthru
          _
        // Predicated region
        $region77: #{tpu_custom_call.1} parent=15 // pred_check
          %p740 = pneg %p461
        $region78: #{tpu_custom_call.1} parent=15 // pred_check_branch
          %742 = sbr.rel (%p740) target = $region80
        $region79: #{tpu_custom_call.1} parent=15 // pred_region
          %p743 = scmp.lt.s32.totalorder %s47, 1
          %s744 = scalar_select %p743, %s47, 1
          %s745 = scalar_lea.vmem %s15, %s744
        $region80: #{tpu_custom_call.1} parent=15 // pred_fallthru
          _
        // Predicated region
        $region81: #{tpu_custom_call.1} parent=15 // pred_check
          %p746 = pneg %p487
        $region82: #{tpu_custom_call.1} parent=15 // pred_check_branch
          %748 = sbr.rel (%p746) target = $region84
        $region83: #{tpu_custom_call.1} parent=15 // pred_region
          %p749 = scmp.lt.s32.totalorder %s47, 1
          %s750 = scalar_select %p749, %s47, 1
          %s751 = scalar_lea.vmem %s16, %s750
        $region84: #{tpu_custom_call.1} parent=15 // pred_fallthru
          _
        // Predicated region
        $region85: #{tpu_custom_call.1} parent=15 // pred_check
          %p752 = pneg %p513
        $region86: #{tpu_custom_call.1} parent=15 // pred_check_branch
          %754 = sbr.rel (%p752) target = $region88
        $region87: #{tpu_custom_call.1} parent=15 // pred_region
          %s755 = sand.u32 %s39, 1
          %s756 = scalar_lea.sflag [#allocation12], %s755
          %s757 = sand.u32 %s503, 1
          %s758 = scalar_lea.vmem [#allocation13], %s757
          %760 = vsyncadd %s756, 0
          %s761 = scalar_lea.hbm %s17, %s47
          %s763 = sshll.u32 %s761, 4
          %s764 = int_to_ptr.hbm [resolvable:$true] %s763
          %s765 = sshll.u32 %s758, 4
          %s766 = int_to_ptr.vmem [resolvable:$true] %s765
          %768 = dma.hbm_to_vmem [thread:$0]  %s764, 16, %s766, %s756
        $region88: #{tpu_custom_call.1} parent=15 // pred_fallthru
          _
      $region16: #{tpu_custom_call.1} parent=5 // pred_fallthru
        _
      %p769 = scmp.le.s32.totalorder 1, %s39
      %p770 = scmp.lt.s32.totalorder %s39, 5
      %p771 = pnand %p769, %p770
      %p772 = pneg %p771
      // Predicated region
      $region89: #{tpu_custom_call.1} parent=5 // pred_check
        _
      $region90: #{tpu_custom_call.1} parent=5 // pred_check_branch
        %774 = sbr.rel (%p771) target = $region92
      $region91: #{tpu_custom_call.1} parent=5 // pred_region
        %s775 = ssub.s32 %s39, 1
        %s776 = sand.u32 %s64, 1
        %s777 = scalar_lea.sflag [#allocation3], %s776
        %s778 = sand.u32 %s64, 1
        %s779 = smul.addr %s778, 8
        %s780 = scalar_lea.vmem [#allocation2], %s779
        // Predicated region
        $region93: #{tpu_custom_call.1} parent=91 // pred_check
          %p781 = pneg %p77
        $region94: #{tpu_custom_call.1} parent=91 // pred_check_branch
          %783 = sbr.rel (%p781) target = $region96
        $region95: #{tpu_custom_call.1} parent=91 // pred_region
          %785 = dma.done %s777, 128
        $region96: #{tpu_custom_call.1} parent=91 // pred_fallthru
          _
        %s786 = sand.u32 %s44, 1
        %s787 = scalar_lea.sflag [#allocation6], %s786
        %s788 = sand.u32 %s90, 1
        %s789 = scalar_lea.vmem [#allocation5], %s788
        // Predicated region
        $region97: #{tpu_custom_call.1} parent=91 // pred_check
          %p790 = pneg %p103
        $region98: #{tpu_custom_call.1} parent=91 // pred_check_branch
          %792 = sbr.rel (%p790) target = $region100
        $region99: #{tpu_custom_call.1} parent=91 // pred_region
          %794 = dma.done %s787, 16
        $region100: #{tpu_custom_call.1} parent=91 // pred_fallthru
          _
        %s795 = sand.u32 %s44, 1
        %s796 = scalar_lea.sflag [#allocation6], %s795
        %s797 = sand.u32 %s142, 1
        %s798 = scalar_lea.vmem [#allocation7], %s797
        // Predicated region
        $region101: #{tpu_custom_call.1} parent=91 // pred_check
          %p799 = pneg %p155
        $region102: #{tpu_custom_call.1} parent=91 // pred_check_branch
          %801 = sbr.rel (%p799) target = $region104
        $region103: #{tpu_custom_call.1} parent=91 // pred_region
          %803 = dma.done %s796, 16
        $region104: #{tpu_custom_call.1} parent=91 // pred_fallthru
          _
        %s804 = sand.u32 %s44, 1
        %s805 = scalar_lea.sflag [#allocation9], %s804
        %s806 = sand.u32 %s272, 1
        %s807 = smul.addr %s806, 16
        %s808 = scalar_lea.vmem [#allocation8], %s807
        // Predicated region
        $region105: #{tpu_custom_call.1} parent=91 // pred_check
          %p809 = pneg %p285
        $region106: #{tpu_custom_call.1} parent=91 // pred_check_branch
          %811 = sbr.rel (%p809) target = $region108
        $region107: #{tpu_custom_call.1} parent=91 // pred_region
          %813 = dma.done %s805, 256
        $region108: #{tpu_custom_call.1} parent=91 // pred_fallthru
          _
        %s814 = sand.u32 %s44, 1
        %s815 = scalar_lea.sflag [#allocation9], %s814
        %s816 = sand.u32 %s350, 1
        %s817 = scalar_lea.vmem [#allocation10], %s816
        // Predicated region
        $region109: #{tpu_custom_call.1} parent=91 // pred_check
          %p818 = pneg %p363
        $region110: #{tpu_custom_call.1} parent=91 // pred_check_branch
          %820 = sbr.rel (%p818) target = $region112
        $region111: #{tpu_custom_call.1} parent=91 // pred_region
          %822 = dma.done %s815, 16
        $region112: #{tpu_custom_call.1} parent=91 // pred_fallthru
          _
        %s823 = sand.u32 %s44, 1
        %s824 = scalar_lea.sflag [#allocation12], %s823
        %s825 = sand.u32 %s376, 1
        %s826 = smul.addr %s825, 16
        %s827 = scalar_lea.vmem [#allocation11], %s826
        // Predicated region
        $region113: #{tpu_custom_call.1} parent=91 // pred_check
          %p828 = pneg %p389
        $region114: #{tpu_custom_call.1} parent=91 // pred_check_branch
          %830 = sbr.rel (%p828) target = $region116
        $region115: #{tpu_custom_call.1} parent=91 // pred_region
          %832 = dma.done %s824, 256
        $region116: #{tpu_custom_call.1} parent=91 // pred_fallthru
          _
        %s833 = sand.u32 %s44, 1
        %s834 = scalar_lea.sflag [#allocation12], %s833
        %s835 = sand.u32 %s506, 1
        %s836 = scalar_lea.vmem [#allocation13], %s835
        // Predicated region
        $region117: #{tpu_custom_call.1} parent=91 // pred_check
          %p837 = pneg %p519
        $region118: #{tpu_custom_call.1} parent=91 // pred_check_branch
          %839 = sbr.rel (%p837) target = $region120
        $region119: #{tpu_custom_call.1} parent=91 // pred_region
          %841 = dma.done %s834, 16
        $region120: #{tpu_custom_call.1} parent=91 // pred_fallthru
          _
        %s842 = sand.u32 %s64, 1
        %s843 = scalar_lea.sflag [#allocation3], %s842
        %s844 = sand.u32 %s64, 1
        %s845 = smul.addr %s844, 8
        %s846 = scalar_lea.vmem [#allocation2], %s845
        %p847 = pneg %p77
        %p848 = pneg %p74
        %s849 = sand.u32 %s44, 1
        %s850 = scalar_lea.sflag [#allocation6], %s849
        %s851 = sand.u32 %s90, 1
        %s852 = scalar_lea.vmem [#allocation5], %s851
        %p853 = pneg %p103
        %p854 = pneg %p100
        %p855 = scmp.lt.s32.totalorder %s49, 1
        %s856 = scalar_select %p855, %s49, 1
        %s857 = smul.addr %s856, 4
        %s858 = smul.addr %s857, 4
        %s859 = scalar_lea.vmem %s2, %s858
        %p860 = pneg %p129
        %p861 = pneg %p126
        %s862 = sand.u32 %s44, 1
        %s863 = scalar_lea.sflag [#allocation6], %s862
        %s864 = sand.u32 %s142, 1
        %s865 = scalar_lea.vmem [#allocation7], %s864
        %p866 = pneg %p155
        %p867 = pneg %p152
        %p868 = scmp.lt.s32.totalorder %s49, 1
        %s869 = scalar_select %p868, %s49, 1
        %s870 = smul.addr %s869, 4
        %s871 = smul.addr %s870, 4
        %s872 = scalar_lea.vmem %s4, %s871
        %p873 = pneg %p181
        %p874 = pneg %p178
        %p875 = scmp.lt.s32.totalorder %s49, 1
        %s876 = scalar_select %p875, %s49, 1
        %s877 = scalar_lea.vmem %s5, %s876
        %p878 = pneg %p207
        %p879 = pneg %p204
        %p880 = scmp.lt.s32.totalorder %s49, 1
        %s881 = scalar_select %p880, %s49, 1
        %s882 = smul.addr %s881, 4
        %s883 = smul.addr %s882, 4
        %s884 = scalar_lea.vmem %s6, %s883
        %p885 = pneg %p233
        %p886 = pneg %p230
        %p887 = scmp.lt.s32.totalorder %s49, 1
        %s888 = scalar_select %p887, %s49, 1
        %s889 = scalar_lea.vmem %s7, %s888
        %p890 = pneg %p259
        %p891 = pneg %p256
        %s892 = sand.u32 %s44, 1
        %s893 = scalar_lea.sflag [#allocation9], %s892
        %s894 = sand.u32 %s272, 1
        %s895 = smul.addr %s894, 16
        %s896 = scalar_lea.vmem [#allocation8], %s895
        %p897 = pneg %p285
        %p898 = pneg %p282
        %p899 = scmp.lt.s32.totalorder %s49, 1
        %s900 = scalar_select %p899, %s49, 1
        %s901 = scalar_lea.vmem %s9, %s900
        %p902 = pneg %p311
        %p903 = pneg %p308
        %p904 = scmp.lt.s32.totalorder %s49, 1
        %s905 = scalar_select %p904, %s49, 1
        %s906 = scalar_lea.vmem %s10, %s905
        %p907 = pneg %p337
        %p908 = pneg %p334
        %s909 = sand.u32 %s44, 1
        %s910 = scalar_lea.sflag [#allocation9], %s909
        %s911 = sand.u32 %s350, 1
        %s912 = scalar_lea.vmem [#allocation10], %s911
        %p913 = pneg %p363
        %p914 = pneg %p360
        %s915 = sand.u32 %s44, 1
        %s916 = scalar_lea.sflag [#allocation12], %s915
        %s917 = sand.u32 %s376, 1
        %s918 = smul.addr %s917, 16
        %s919 = scalar_lea.vmem [#allocation11], %s918
        %p920 = pneg %p389
        %p921 = pneg %p386
        %p922 = scmp.lt.s32.totalorder %s49, 1
        %s923 = scalar_select %p922, %s49, 1
        %s924 = scalar_lea.vmem %s13, %s923
        %p925 = pneg %p415
        %p926 = pneg %p412
        %p927 = scmp.lt.s32.totalorder %s49, 1
        %s928 = scalar_select %p927, %s49, 1
        %s929 = smul.addr %s928, 8
        %s930 = smul.addr %s929, 4
        %s931 = scalar_lea.vmem %s14, %s930
        %p932 = pneg %p441
        %p933 = pneg %p438
        %p934 = scmp.lt.s32.totalorder %s49, 1
        %s935 = scalar_select %p934, %s49, 1
        %s936 = scalar_lea.vmem %s15, %s935
        %p937 = pneg %p467
        %p938 = pneg %p464
        %p939 = scmp.lt.s32.totalorder %s49, 1
        %s940 = scalar_select %p939, %s49, 1
        %s941 = scalar_lea.vmem %s16, %s940
        %p942 = pneg %p493
        %p943 = pneg %p490
        %s944 = sand.u32 %s44, 1
        %s945 = scalar_lea.sflag [#allocation12], %s944
        %s946 = sand.u32 %s506, 1
        %s947 = scalar_lea.vmem [#allocation13], %s946
        %p948 = pneg %p519
        %p949 = pneg %p516
        %p950 = pneg %p545
        %p951 = pneg %p542
        %s952 = sand.u32 %s532, 1
        %s953 = scalar_lea.sflag [#allocation4], %s952
        %s954 = sand.u32 %s532, 1
        %s955 = smul.addr %s954, 8
        %s956 = scalar_lea.vmem [#allocation14], %s955
        %p957 = scmp.lt.s32.totalorder %s49, 1
        %s958 = scalar_select %p957, %s49, 1
        %s959 = smul.addr %s958, 4
        %s960 = smul.addr %s959, 4
        %s961 = scalar_lea.vmem %s2, %s960
        %p962 = scmp.lt.s32.totalorder %s49, 1
        %s963 = scalar_select %p962, %s49, 1
        %s964 = smul.addr %s963, 4
        %s965 = smul.addr %s964, 4
        %s966 = scalar_lea.vmem %s4, %s965
        %p967 = scmp.lt.s32.totalorder %s49, 1
        %s968 = scalar_select %p967, %s49, 1
        %s969 = scalar_lea.vmem %s5, %s968
        %p970 = scmp.lt.s32.totalorder %s49, 1
        %s971 = scalar_select %p970, %s49, 1
        %s972 = smul.addr %s971, 4
        %s973 = smul.addr %s972, 4
        %s974 = scalar_lea.vmem %s6, %s973
        %p975 = scmp.lt.s32.totalorder %s49, 1
        %s976 = scalar_select %p975, %s49, 1
        %s977 = scalar_lea.vmem %s7, %s976
        %p978 = scmp.lt.s32.totalorder %s49, 1
        %s979 = scalar_select %p978, %s49, 1
        %s980 = scalar_lea.vmem %s9, %s979
        %p981 = scmp.lt.s32.totalorder %s49, 1
        %s982 = scalar_select %p981, %s49, 1
        %s983 = scalar_lea.vmem %s10, %s982
        %p984 = scmp.lt.s32.totalorder %s49, 1
        %s985 = scalar_select %p984, %s49, 1
        %s986 = scalar_lea.vmem %s13, %s985
        %p987 = scmp.lt.s32.totalorder %s49, 1
        %s988 = scalar_select %p987, %s49, 1
        %s989 = smul.addr %s988, 8
        %s990 = smul.addr %s989, 4
        %s991 = scalar_lea.vmem %s14, %s990
        %p992 = scmp.lt.s32.totalorder %s49, 1
        %s993 = scalar_select %p992, %s49, 1
        %s994 = scalar_lea.vmem %s15, %s993
        %p995 = scmp.lt.s32.totalorder %s49, 1
        %s996 = scalar_select %p995, %s49, 1
        %s997 = scalar_lea.vmem %s16, %s996
        %p999 = scmp.eq.s32.totalorder %s49, 0
        // Predicated region
        $region121: #{tpu_custom_call.1} parent=91 // pred_check
          %p1000 = pneg %p999
        $region122: #{tpu_custom_call.1} parent=91 // pred_check_branch
          %1002 = sbr.rel (%p1000) target = $region124
        $region123: #{tpu_custom_call.1} parent=91 // pred_region
          %v1003 = vld [vmem:[%s780] sm:$0xff]
          %vm1004 = vcmask 261120
          %1005 = vst.msk [vmem:[%s956] sm:$0xff] %vm1004, %v1003
        $region124: #{tpu_custom_call.1} parent=91 // pred_fallthru
          _
        %v1006 = vld [vmem:[%s956] sm:$0xff]
        %v1007 = vpack.c.bf16 %v1006, %v1006
        %v1008 = vld [vmem:[%s961] sm:$0xf]
        %v1009 = vld [vmem:[%s961 + $0x4] sm:$0xf]
        %v1010 = vld [vmem:[%s961 + $0x8] sm:$0xf]
        %v1011 = vld [vmem:[%s961 + $0xc] sm:$0xf]
        %v1012 = vld [vmem:[%s798] sm:$0x1]
        %v1014 = vperm.slane %v1012, 0
        %v1020 = vunpack.c.l.b16 %v1008
        %v1021 = vunpack.c.l.b16 %v1009
        %v1022 = vunpack.c.l.b16 %v1010
        %v1023 = vunpack.c.l.b16 %v1011
        %v1024 = vpack.c.b16 %v1021, %v1020
        %v1025 = vpack.c.b16 %v1023, %v1022
        %vm1028 = vcmask 261120
        %v1030 = vsel %vm1028, %v1007, 0
        %1032 = vmatpush.bf16.msra.mxu0 0
        %1033 = vmatpush.bf16.msra.mxu0 0
        %1034 = vmatpush.bf16.msra.mxu0 0
        %1035 = vmatpush.bf16.msra.mxu0 0
        %1036 = vmatpush.bf16.msra.mxu0 0
        %1037 = vmatpush.bf16.msra.mxu0 0
        %1038 = vmatpush.bf16.msra.mxu0 %v1025
        %1039 = vmatpush.bf16.msra.mxu0 %v1024
        %1040 = vmatmul.bf16.gmra.mxu0 %v1030
        %v1041 = vpop.f32.mrf.mxu0
        %v1042 = vadd.f32 %v1014, %v1041
        %v1043 = vpop.f32.mrf.mxu0
        %1044 = vdwg.mxu0
        %v1045 = vld [vmem:[%s966] sm:$0xf]
        %v1046 = vld [vmem:[%s966 + $0x4] sm:$0xf]
        %v1047 = vld [vmem:[%s966 + $0x8] sm:$0xf]
        %v1048 = vld [vmem:[%s966 + $0xc] sm:$0xf]
        %v1049 = vld [vmem:[%s969] sm:$0x1]
        %v1051 = vperm.slane %v1049, 0
        %v1057 = vunpack.c.l.b16 %v1045
        %v1058 = vunpack.c.l.b16 %v1046
        %v1059 = vunpack.c.l.b16 %v1047
        %v1060 = vunpack.c.l.b16 %v1048
        %v1061 = vpack.c.b16 %v1058, %v1057
        %v1062 = vpack.c.b16 %v1060, %v1059
        %1065 = vmatpush.bf16.msra.mxu0 0
        %1066 = vmatpush.bf16.msra.mxu0 0
        %1067 = vmatpush.bf16.msra.mxu0 0
        %1068 = vmatpush.bf16.msra.mxu0 0
        %1069 = vmatpush.bf16.msra.mxu0 0
        %1070 = vmatpush.bf16.msra.mxu0 0
        %1071 = vmatpush.bf16.msra.mxu0 %v1062
        %1072 = vmatpush.bf16.msra.mxu0 %v1061
        %1073 = vmatmul.bf16.gmra.mxu0 %v1030
        %v1074 = vpop.f32.mrf.mxu0
        %v1075 = vadd.f32 %v1051, %v1074
        %v1076 = vpop.f32.mrf.mxu0
        %1077 = vdwg.mxu0
        %v1078 = vld [vmem:[%s974] sm:$0xf]
        %v1079 = vld [vmem:[%s974 + $0x4] sm:$0xf]
        %v1080 = vld [vmem:[%s974 + $0x8] sm:$0xf]
        %v1081 = vld [vmem:[%s974 + $0xc] sm:$0xf]
        %v1082 = vld [vmem:[%s977] sm:$0x1]
        %v1084 = vperm.slane %v1082, 0
        %v1090 = vunpack.c.l.b16 %v1078
        %v1091 = vunpack.c.l.b16 %v1079
        %v1092 = vunpack.c.l.b16 %v1080
        %v1093 = vunpack.c.l.b16 %v1081
        %v1094 = vpack.c.b16 %v1091, %v1090
        %v1095 = vpack.c.b16 %v1093, %v1092
        %1098 = vmatpush.bf16.msra.mxu0 0
        %1099 = vmatpush.bf16.msra.mxu0 0
        %1100 = vmatpush.bf16.msra.mxu0 0
        %1101 = vmatpush.bf16.msra.mxu0 0
        %1102 = vmatpush.bf16.msra.mxu0 0
        %1103 = vmatpush.bf16.msra.mxu0 0
        %1104 = vmatpush.bf16.msra.mxu0 %v1095
        %1105 = vmatpush.bf16.msra.mxu0 %v1094
        %1106 = vmatmul.bf16.gmra.mxu0 %v1030
        %v1107 = vpop.f32.mrf.mxu0
        %v1108 = vadd.f32 %v1084, %v1107
        %v1109 = vpop.f32.mrf.mxu0
        %1110 = vdwg.mxu0
        %v1111 = vmul.f32 %v1042, 0.35355338
        %v1112 = vpack.c.bf16 %v1111, %v1111
        %1114 = vrot.lane.b32.xlu0 %v1112, 120
        %v1115 = vpop.permute.xlu0 %1114
        %1116 = vrot.lane.b32.xlu0 %v1112, 112
        %v1117 = vpop.permute.xlu0 %1116
        %1118 = vrot.lane.b32.xlu0 %v1112, 104
        %v1119 = vpop.permute.xlu0 %1118
        %v1122 = vpack.i.b16 %v1115, %v1112
        %v1123 = vshrl.u32 %v1112, 16
        %v1124 = vshrl.u32 %v1115, 16
        %v1125 = vpack.i.b16 %v1124, %v1123
        %v1128 = vpack.i.b16 %v1119, %v1117
        %v1129 = vshrl.u32 %v1117, 16
        %v1130 = vshrl.u32 %v1119, 16
        %v1131 = vpack.i.b16 %v1130, %v1129
        %v1134 = vunpack.c.l.s4 1983009808
        %v1135 = vunpack.c.0.s8 %v1134
        %v1136 = vperm.slane %v1122, %v1135
        %v1139 = vunpack.c.l.s4 1983009808
        %v1140 = vunpack.c.0.s8 %v1139
        %v1141 = vperm.slane %v1128, %v1140
        %v1142 = vrot.slane %v1141, 4
        %vm1143 = vcmask 1047556
        %v1144 = vsel %vm1143, %v1142, %v1136
        %v1145 = vrot.slane %v1136, 4
        %v1146 = vsel %vm1143, %v1141, %v1145
        %v1148 = vunpack.c.l.s4 1934713408
        %v1149 = vunpack.c.0.s8 %v1148
        %v1150 = vperm.slane %v1144, %v1149
        %v1152 = vunpack.c.l.s4 1934713408
        %v1153 = vunpack.c.0.s8 %v1152
        %v1154 = vperm.slane %v1146, %v1153
        %v1155 = vrot.slane %v1150, 4
        %v1156 = vsel %vm1143, 0, %v1155
        %v1157 = vrot.slane %v1154, 4
        %v1158 = vsel %vm1143, 0, %v1157
        %v1161 = vunpack.c.l.s4 1983009808
        %v1162 = vunpack.c.0.s8 %v1161
        %v1163 = vperm.slane %v1125, %v1162
        %v1166 = vunpack.c.l.s4 1983009808
        %v1167 = vunpack.c.0.s8 %v1166
        %v1168 = vperm.slane %v1131, %v1167
        %v1169 = vrot.slane %v1168, 4
        %v1170 = vsel %vm1143, %v1169, %v1163
        %v1171 = vrot.slane %v1163, 4
        %v1172 = vsel %vm1143, %v1168, %v1171
        %v1174 = vunpack.c.l.s4 1934713408
        %v1175 = vunpack.c.0.s8 %v1174
        %v1176 = vperm.slane %v1170, %v1175
        %v1178 = vunpack.c.l.s4 1934713408
        %v1179 = vunpack.c.0.s8 %v1178
        %v1180 = vperm.slane %v1172, %v1179
        %v1181 = vrot.slane %v1176, 4
        %v1182 = vsel %vm1143, 0, %v1181
        %v1183 = vrot.slane %v1180, 4
        %v1184 = vsel %vm1143, 0, %v1183
        %v1185 = vsel %vm1143, %v1157, %v1150
        %v1187 = vunpack.c.l.s4 1983009808
        %v1188 = vunpack.c.0.s8 %v1187
        %v1189 = vperm.slane %v1185, %v1188
        %v1190 = vrot.slane %v1158, 4
        %v1191 = vsel %vm1143, %v1190, %v1156
        %v1193 = vunpack.c.l.s4 1983009808
        %v1194 = vunpack.c.0.s8 %v1193
        %v1195 = vperm.slane %v1191, %v1194
        %v1196 = vrot.slane %v1195, 4
        %v1197 = vsel %vm1143, %v1196, %v1189
        %v1199 = vunpack.c.l.s4 1934713408
        %v1200 = vunpack.c.0.s8 %v1199
        %v1201 = vperm.slane %v1197, %v1200
        %v1202 = vrot.slane %v1201, 4
        %v1203 = vsel %vm1143, 0, %v1202
        %v1204 = vsel %vm1143, %v1183, %v1176
        %v1206 = vunpack.c.l.s4 1983009808
        %v1207 = vunpack.c.0.s8 %v1206
        %v1208 = vperm.slane %v1204, %v1207
        %v1209 = vrot.slane %v1184, 4
        %v1210 = vsel %vm1143, %v1209, %v1182
        %v1212 = vunpack.c.l.s4 1983009808
        %v1213 = vunpack.c.0.s8 %v1212
        %v1214 = vperm.slane %v1210, %v1213
        %v1215 = vrot.slane %v1214, 4
        %v1216 = vsel %vm1143, %v1215, %v1208
        %v1218 = vunpack.c.l.s4 1934713408
        %v1219 = vunpack.c.0.s8 %v1218
        %v1220 = vperm.slane %v1216, %v1219
        %v1221 = vrot.slane %v1220, 4
        %v1222 = vsel %vm1143, 0, %v1221
        %v1225 = vpack.i.b16 %v1220, %v1201
        %v1226 = vshrl.u32 %v1201, 16
        %v1227 = vshrl.u32 %v1220, 16
        %v1228 = vpack.i.b16 %v1227, %v1226
        %v1231 = vpack.i.b16 %v1222, %v1203
        %v1232 = vshrl.u32 %v1203, 16
        %v1233 = vshrl.u32 %v1222, 16
        %v1234 = vpack.i.b16 %v1233, %v1232
        %v1235 = vpack.c.bf16 %v1075, %v1075
        %1237 = vrot.lane.b32.xlu0 %v1235, 120
        %v1238 = vpop.permute.xlu0 %1237
        %1239 = vrot.lane.b32.xlu0 %v1235, 112
        %v1240 = vpop.permute.xlu0 %1239
        %1241 = vrot.lane.b32.xlu0 %v1235, 104
        %v1242 = vpop.permute.xlu0 %1241
        %v1245 = vpack.i.b16 %v1238, %v1235
        %v1246 = vshrl.u32 %v1235, 16
        %v1247 = vshrl.u32 %v1238, 16
        %v1248 = vpack.i.b16 %v1247, %v1246
        %v1251 = vpack.i.b16 %v1242, %v1240
        %v1252 = vshrl.u32 %v1240, 16
        %v1253 = vshrl.u32 %v1242, 16
        %v1254 = vpack.i.b16 %v1253, %v1252
        %v1257 = vunpack.c.l.s4 1983009808
        %v1258 = vunpack.c.0.s8 %v1257
        %v1259 = vperm.slane %v1245, %v1258
        %v1262 = vunpack.c.l.s4 1983009808
        %v1263 = vunpack.c.0.s8 %v1262
        %v1264 = vperm.slane %v1251, %v1263
        %v1265 = vrot.slane %v1264, 4
        %v1266 = vsel %vm1143, %v1265, %v1259
        %v1267 = vrot.slane %v1259, 4
        %v1268 = vsel %vm1143, %v1264, %v1267
        %v1270 = vunpack.c.l.s4 1934713408
        %v1271 = vunpack.c.0.s8 %v1270
        %v1272 = vperm.slane %v1266, %v1271
        %v1274 = vunpack.c.l.s4 1934713408
        %v1275 = vunpack.c.0.s8 %v1274
        %v1276 = vperm.slane %v1268, %v1275
        %v1277 = vrot.slane %v1272, 4
        %v1278 = vsel %vm1143, 0, %v1277
        %v1279 = vrot.slane %v1276, 4
        %v1280 = vsel %vm1143, 0, %v1279
        %v1283 = vunpack.c.l.s4 1983009808
        %v1284 = vunpack.c.0.s8 %v1283
        %v1285 = vperm.slane %v1248, %v1284
        %v1288 = vunpack.c.l.s4 1983009808
        %v1289 = vunpack.c.0.s8 %v1288
        %v1290 = vperm.slane %v1254, %v1289
        %v1291 = vrot.slane %v1290, 4
        %v1292 = vsel %vm1143, %v1291, %v1285
        %v1293 = vrot.slane %v1285, 4
        %v1294 = vsel %vm1143, %v1290, %v1293
        %v1296 = vunpack.c.l.s4 1934713408
        %v1297 = vunpack.c.0.s8 %v1296
        %v1298 = vperm.slane %v1292, %v1297
        %v1300 = vunpack.c.l.s4 1934713408
        %v1301 = vunpack.c.0.s8 %v1300
        %v1302 = vperm.slane %v1294, %v1301
        %v1303 = vrot.slane %v1298, 4
        %v1304 = vsel %vm1143, 0, %v1303
        %v1305 = vrot.slane %v1302, 4
        %v1306 = vsel %vm1143, 0, %v1305
        %v1307 = vsel %vm1143, %v1279, %v1272
        %v1309 = vunpack.c.l.s4 1983009808
        %v1310 = vunpack.c.0.s8 %v1309
        %v1311 = vperm.slane %v1307, %v1310
        %v1312 = vrot.slane %v1280, 4
        %v1313 = vsel %vm1143, %v1312, %v1278
        %v1315 = vunpack.c.l.s4 1983009808
        %v1316 = vunpack.c.0.s8 %v1315
        %v1317 = vperm.slane %v1313, %v1316
        %v1318 = vrot.slane %v1317, 4
        %v1319 = vsel %vm1143, %v1318, %v1311
        %v1321 = vunpack.c.l.s4 1934713408
        %v1322 = vunpack.c.0.s8 %v1321
        %v1323 = vperm.slane %v1319, %v1322
        %v1324 = vrot.slane %v1323, 4
        %v1325 = vsel %vm1143, 0, %v1324
        %v1326 = vsel %vm1143, %v1305, %v1298
        %v1328 = vunpack.c.l.s4 1983009808
        %v1329 = vunpack.c.0.s8 %v1328
        %v1330 = vperm.slane %v1326, %v1329
        %v1331 = vrot.slane %v1306, 4
        %v1332 = vsel %vm1143, %v1331, %v1304
        %v1334 = vunpack.c.l.s4 1983009808
        %v1335 = vunpack.c.0.s8 %v1334
        %v1336 = vperm.slane %v1332, %v1335
        %v1337 = vrot.slane %v1336, 4
        %v1338 = vsel %vm1143, %v1337, %v1330
        %v1340 = vunpack.c.l.s4 1934713408
        %v1341 = vunpack.c.0.s8 %v1340
        %v1342 = vperm.slane %v1338, %v1341
        %v1343 = vrot.slane %v1342, 4
        %v1344 = vsel %vm1143, 0, %v1343
        %v1347 = vpack.i.b16 %v1342, %v1323
        %v1348 = vshrl.u32 %v1323, 16
        %v1349 = vshrl.u32 %v1342, 16
        %v1350 = vpack.i.b16 %v1349, %v1348
        %v1353 = vpack.i.b16 %v1344, %v1325
        %v1354 = vshrl.u32 %v1325, 16
        %v1355 = vshrl.u32 %v1344, 16
        %v1356 = vpack.i.b16 %v1355, %v1354
        %v1357 = vpack.c.bf16 %v1108, %v1108
        %1359 = vrot.lane.b32.xlu0 %v1357, 120
        %v1360 = vpop.permute.xlu0 %1359
        %1361 = vrot.lane.b32.xlu0 %v1357, 112
        %v1362 = vpop.permute.xlu0 %1361
        %1363 = vrot.lane.b32.xlu0 %v1357, 104
        %v1364 = vpop.permute.xlu0 %1363
        %v1367 = vpack.i.b16 %v1360, %v1357
        %v1368 = vshrl.u32 %v1357, 16
        %v1369 = vshrl.u32 %v1360, 16
        %v1370 = vpack.i.b16 %v1369, %v1368
        %v1373 = vpack.i.b16 %v1364, %v1362
        %v1374 = vshrl.u32 %v1362, 16
        %v1375 = vshrl.u32 %v1364, 16
        %v1376 = vpack.i.b16 %v1375, %v1374
        %v1379 = vunpack.c.l.s4 1983009808
        %v1380 = vunpack.c.0.s8 %v1379
        %v1381 = vperm.slane %v1367, %v1380
        %v1384 = vunpack.c.l.s4 1983009808
        %v1385 = vunpack.c.0.s8 %v1384
        %v1386 = vperm.slane %v1373, %v1385
        %v1387 = vrot.slane %v1386, 4
        %v1388 = vsel %vm1143, %v1387, %v1381
        %v1389 = vrot.slane %v1381, 4
        %v1390 = vsel %vm1143, %v1386, %v1389
        %v1392 = vunpack.c.l.s4 1934713408
        %v1393 = vunpack.c.0.s8 %v1392
        %v1394 = vperm.slane %v1388, %v1393
        %v1396 = vunpack.c.l.s4 1934713408
        %v1397 = vunpack.c.0.s8 %v1396
        %v1398 = vperm.slane %v1390, %v1397
        %v1399 = vrot.slane %v1394, 4
        %v1400 = vsel %vm1143, 0, %v1399
        %v1401 = vrot.slane %v1398, 4
        %v1402 = vsel %vm1143, 0, %v1401
        %v1405 = vunpack.c.l.s4 1983009808
        %v1406 = vunpack.c.0.s8 %v1405
        %v1407 = vperm.slane %v1370, %v1406
        %v1410 = vunpack.c.l.s4 1983009808
        %v1411 = vunpack.c.0.s8 %v1410
        %v1412 = vperm.slane %v1376, %v1411
        %v1413 = vrot.slane %v1412, 4
        %v1414 = vsel %vm1143, %v1413, %v1407
        %v1415 = vrot.slane %v1407, 4
        %v1416 = vsel %vm1143, %v1412, %v1415
        %v1418 = vunpack.c.l.s4 1934713408
        %v1419 = vunpack.c.0.s8 %v1418
        %v1420 = vperm.slane %v1414, %v1419
        %v1422 = vunpack.c.l.s4 1934713408
        %v1423 = vunpack.c.0.s8 %v1422
        %v1424 = vperm.slane %v1416, %v1423
        %v1425 = vrot.slane %v1420, 4
        %v1426 = vsel %vm1143, 0, %v1425
        %v1427 = vrot.slane %v1424, 4
        %v1428 = vsel %vm1143, 0, %v1427
        %v1429 = vsel %vm1143, %v1401, %v1394
        %v1431 = vunpack.c.l.s4 1983009808
        %v1432 = vunpack.c.0.s8 %v1431
        %v1433 = vperm.slane %v1429, %v1432
        %v1434 = vrot.slane %v1402, 4
        %v1435 = vsel %vm1143, %v1434, %v1400
        %v1437 = vunpack.c.l.s4 1983009808
        %v1438 = vunpack.c.0.s8 %v1437
        %v1439 = vperm.slane %v1435, %v1438
        %v1440 = vrot.slane %v1439, 4
        %v1441 = vsel %vm1143, %v1440, %v1433
        %v1443 = vunpack.c.l.s4 1934713408
        %v1444 = vunpack.c.0.s8 %v1443
        %v1445 = vperm.slane %v1441, %v1444
        %v1446 = vrot.slane %v1445, 4
        %v1447 = vsel %vm1143, 0, %v1446
        %v1448 = vsel %vm1143, %v1427, %v1420
        %v1450 = vunpack.c.l.s4 1983009808
        %v1451 = vunpack.c.0.s8 %v1450
        %v1452 = vperm.slane %v1448, %v1451
        %v1453 = vrot.slane %v1428, 4
        %v1454 = vsel %vm1143, %v1453, %v1426
        %v1456 = vunpack.c.l.s4 1983009808
        %v1457 = vunpack.c.0.s8 %v1456
        %v1458 = vperm.slane %v1454, %v1457
        %v1459 = vrot.slane %v1458, 4
        %v1460 = vsel %vm1143, %v1459, %v1452
        %v1462 = vunpack.c.l.s4 1934713408
        %v1463 = vunpack.c.0.s8 %v1462
        %v1464 = vperm.slane %v1460, %v1463
        %v1465 = vrot.slane %v1464, 4
        %v1466 = vsel %vm1143, 0, %v1465
        %v1469 = vpack.i.b16 %v1464, %v1445
        %v1470 = vshrl.u32 %v1445, 16
        %v1471 = vshrl.u32 %v1464, 16
        %v1472 = vpack.i.b16 %v1471, %v1470
        %v1475 = vpack.i.b16 %v1466, %v1447
        %v1476 = vshrl.u32 %v1447, 16
        %v1477 = vshrl.u32 %v1466, 16
        %v1478 = vpack.i.b16 %v1477, %v1476
        %v1479 = vld [vmem:[%s789] sm:$0x1]
        %v1481 = vperm.slane %v1479, 0
        %vm1483 = vcmask 64512
        %v1485 = vsel %vm1483, %v1225, 0
        %v1488 = vsel %vm1483, %v1347, 0
        %1490 = vmatpush.bf16.xpose.msra.mxu0 0
        %1491 = vmatpush.bf16.xpose.msra.mxu0 0
        %1492 = vmatpush.bf16.xpose.msra.mxu0 0
        %1493 = vmatpush.bf16.xpose.msra.mxu0 0
        %1494 = vmatpush.bf16.xpose.msra.mxu0 0
        %1495 = vmatpush.bf16.xpose.msra.mxu0 0
        %1496 = vmatpush.bf16.xpose.msra.mxu0 0
        %1497 = vmatpush.bf16.xpose.msra.mxu0 %v1488
        %1498 = vmatmul.bf16.gmra.mxu0 %v1485
        %v1499 = vpop.f32.mrf.mxu0
        %v1500 = vadd.f32 %v1481, %v1499
        %v1501 = vpop.f32.mrf.mxu0
        %1502 = vdwg.mxu0
        %v1504 = vsel %vm1483, %v1228, 0
        %v1507 = vsel %vm1483, %v1350, 0
        %1509 = vmatpush.bf16.xpose.msra.mxu0 0
        %1510 = vmatpush.bf16.xpose.msra.mxu0 0
        %1511 = vmatpush.bf16.xpose.msra.mxu0 0
        %1512 = vmatpush.bf16.xpose.msra.mxu0 0
        %1513 = vmatpush.bf16.xpose.msra.mxu0 0
        %1514 = vmatpush.bf16.xpose.msra.mxu0 0
        %1515 = vmatpush.bf16.xpose.msra.mxu0 0
        %1516 = vmatpush.bf16.xpose.msra.mxu0 %v1507
        %1517 = vmatmul.bf16.gmra.mxu0 %v1504
        %v1518 = vpop.f32.mrf.mxu0
        %v1519 = vadd.f32 %v1481, %v1518
        %v1520 = vpop.f32.mrf.mxu0
        %1521 = vdwg.mxu0
        %v1523 = vsel %vm1483, %v1231, 0
        %v1526 = vsel %vm1483, %v1353, 0
        %1528 = vmatpush.bf16.xpose.msra.mxu0 0
        %1529 = vmatpush.bf16.xpose.msra.mxu0 0
        %1530 = vmatpush.bf16.xpose.msra.mxu0 0
        %1531 = vmatpush.bf16.xpose.msra.mxu0 0
        %1532 = vmatpush.bf16.xpose.msra.mxu0 0
        %1533 = vmatpush.bf16.xpose.msra.mxu0 0
        %1534 = vmatpush.bf16.xpose.msra.mxu0 0
        %1535 = vmatpush.bf16.xpose.msra.mxu0 %v1526
        %1536 = vmatmul.bf16.gmra.mxu0 %v1523
        %v1537 = vpop.f32.mrf.mxu0
        %v1538 = vadd.f32 %v1481, %v1537
        %v1539 = vpop.f32.mrf.mxu0
        %1540 = vdwg.mxu0
        %v1542 = vsel %vm1483, %v1234, 0
        %v1545 = vsel %vm1483, %v1356, 0
        %1547 = vmatpush.bf16.xpose.msra.mxu0 0
        %1548 = vmatpush.bf16.xpose.msra.mxu0 0
        %1549 = vmatpush.bf16.xpose.msra.mxu0 0
        %1550 = vmatpush.bf16.xpose.msra.mxu0 0
        %1551 = vmatpush.bf16.xpose.msra.mxu0 0
        %1552 = vmatpush.bf16.xpose.msra.mxu0 0
        %1553 = vmatpush.bf16.xpose.msra.mxu0 0
        %1554 = vmatpush.bf16.xpose.msra.mxu0 %v1545
        %1555 = vmatmul.bf16.gmra.mxu0 %v1542
        %v1556 = vpop.f32.mrf.mxu0
        %v1557 = vadd.f32 %v1481, %v1556
        %v1558 = vpop.f32.mrf.mxu0
        %1559 = vdwg.mxu0
        %v1560 = vsel %vm1483, %v1500, -inf
        %1561 = vmax.xlane.f32.xlu0 %v1560
        %v1562 = vpop.xlane.xlu0 %1561
        %v1563 = vsel %vm1483, %v1519, -inf
        %1564 = vmax.xlane.f32.xlu0 %v1563
        %v1565 = vpop.xlane.xlu0 %1564
        %v1566 = vsel %vm1483, %v1538, -inf
        %1567 = vmax.xlane.f32.xlu0 %v1566
        %v1568 = vpop.xlane.xlu0 %1567
        %v1569 = vsel %vm1483, %v1557, -inf
        %1570 = vmax.xlane.f32.xlu0 %v1569
        %v1571 = vpop.xlane.xlu0 %1570
        %v1572 = vsub.f32 %v1500, %v1562
        %v1573 = vsub.f32 %v1519, %v1565
        %v1574 = vsub.f32 %v1538, %v1568
        %v1575 = vsub.f32 %v1557, %v1571
        %v1576 = vmul.f32 %v1572, 1.442695
        %v1577 = vpow.pop %v1576
        %v1578 = vmul.f32 %v1573, 1.442695
        %v1579 = vpow.pop %v1578
        %v1580 = vmul.f32 %v1574, 1.442695
        %v1581 = vpow.pop %v1580
        %v1582 = vmul.f32 %v1575, 1.442695
        %v1583 = vpow.pop %v1582
        %v1584 = vsel %vm1483, %v1577, 0.0
        %1585 = vadd.xlane.f32.xlu0 %v1584
        %v1586 = vpop.xlane.xlu0 %1585
        %v1587 = vsel %vm1483, %v1579, 0.0
        %1588 = vadd.xlane.f32.xlu0 %v1587
        %v1589 = vpop.xlane.xlu0 %1588
        %v1590 = vsel %vm1483, %v1581, 0.0
        %1591 = vadd.xlane.f32.xlu0 %v1590
        %v1592 = vpop.xlane.xlu0 %1591
        %v1593 = vsel %vm1483, %v1583, 0.0
        %1594 = vadd.xlane.f32.xlu0 %v1593
        %v1595 = vpop.xlane.xlu0 %1594
        %v1596 = vrcp.pop %v1586
        %v1597 = vrcp.pop %v1589
        %v1598 = vrcp.pop %v1592
        %v1599 = vrcp.pop %v1595
        %v1600 = vmul.f32 %v1577, %v1596
        %v1601 = vmul.f32 %v1579, %v1597
        %v1602 = vmul.f32 %v1581, %v1598
        %v1603 = vmul.f32 %v1583, %v1599
        %v1604 = vpack.c.bf16 %v1600, %v1600
        %v1605 = vpack.c.bf16 %v1601, %v1601
        %v1606 = vpack.c.bf16 %v1602, %v1602
        %v1607 = vpack.c.bf16 %v1603, %v1603
        %v1609 = vsel %vm1483, %v1604, 0
        %vm1611 = vcmask 1043456
        %v1613 = vsel %vm1611, %v1469, 0
        %1615 = vmatpush.bf16.msra.mxu0 0
        %1616 = vmatpush.bf16.msra.mxu0 0
        %1617 = vmatpush.bf16.msra.mxu0 0
        %1618 = vmatpush.bf16.msra.mxu0 0
        %1619 = vmatpush.bf16.msra.mxu0 0
        %1620 = vmatpush.bf16.msra.mxu0 0
        %1621 = vmatpush.bf16.msra.mxu0 0
        %1622 = vmatpush.bf16.msra.mxu0 %v1613
        %1623 = vmatmul.bf16.gmra.mxu0 %v1609
        %v1624 = vpop.f32.mrf.mxu0
        %v1625 = vadd.f32 0.0, %v1624
        %v1626 = vpop.f32.mrf.mxu0
        %1627 = vdwg.mxu0
        %v1629 = vsel %vm1483, %v1605, 0
        %v1632 = vsel %vm1611, %v1472, 0
        %1634 = vmatpush.bf16.msra.mxu0 0
        %1635 = vmatpush.bf16.msra.mxu0 0
        %1636 = vmatpush.bf16.msra.mxu0 0
        %1637 = vmatpush.bf16.msra.mxu0 0
        %1638 = vmatpush.bf16.msra.mxu0 0
        %1639 = vmatpush.bf16.msra.mxu0 0
        %1640 = vmatpush.bf16.msra.mxu0 0
        %1641 = vmatpush.bf16.msra.mxu0 %v1632
        %1642 = vmatmul.bf16.gmra.mxu0 %v1629
        %v1643 = vpop.f32.mrf.mxu0
        %v1644 = vadd.f32 0.0, %v1643
        %v1645 = vpop.f32.mrf.mxu0
        %1646 = vdwg.mxu0
        %v1648 = vsel %vm1483, %v1606, 0
        %v1651 = vsel %vm1611, %v1475, 0
        %1653 = vmatpush.bf16.msra.mxu0 0
        %1654 = vmatpush.bf16.msra.mxu0 0
        %1655 = vmatpush.bf16.msra.mxu0 0
        %1656 = vmatpush.bf16.msra.mxu0 0
        %1657 = vmatpush.bf16.msra.mxu0 0
        %1658 = vmatpush.bf16.msra.mxu0 0
        %1659 = vmatpush.bf16.msra.mxu0 0
        %1660 = vmatpush.bf16.msra.mxu0 %v1651
        %1661 = vmatmul.bf16.gmra.mxu0 %v1648
        %v1662 = vpop.f32.mrf.mxu0
        %v1663 = vadd.f32 0.0, %v1662
        %v1664 = vpop.f32.mrf.mxu0
        %1665 = vdwg.mxu0
        %v1667 = vsel %vm1483, %v1607, 0
        %v1670 = vsel %vm1611, %v1478, 0
        %1672 = vmatpush.bf16.msra.mxu0 0
        %1673 = vmatpush.bf16.msra.mxu0 0
        %1674 = vmatpush.bf16.msra.mxu0 0
        %1675 = vmatpush.bf16.msra.mxu0 0
        %1676 = vmatpush.bf16.msra.mxu0 0
        %1677 = vmatpush.bf16.msra.mxu0 0
        %1678 = vmatpush.bf16.msra.mxu0 0
        %1679 = vmatpush.bf16.msra.mxu0 %v1670
        %1680 = vmatmul.bf16.gmra.mxu0 %v1667
        %v1681 = vpop.f32.mrf.mxu0
        %v1682 = vadd.f32 0.0, %v1681
        %v1683 = vpop.f32.mrf.mxu0
        %1684 = vdwg.mxu0
        %v1685 = vrot.slane %v1663, 4
        %vm1686 = vcmask 1047556
        %v1687 = vsel %vm1686, %v1685, %v1625
        %v1688 = vrot.slane %v1625, 4
        %v1689 = vsel %vm1686, %v1663, %v1688
        %v1691 = vunpack.c.l.s4 1983009808
        %v1692 = vunpack.c.0.s8 %v1691
        %v1693 = vperm.slane %v1687, %v1692
        %v1695 = vunpack.c.l.s4 1983009808
        %v1696 = vunpack.c.0.s8 %v1695
        %v1697 = vperm.slane %v1689, %v1696
        %v1698 = vrot.slane %v1682, 4
        %v1699 = vsel %vm1686, %v1698, %v1644
        %v1700 = vrot.slane %v1644, 4
        %v1701 = vsel %vm1686, %v1682, %v1700
        %v1703 = vunpack.c.l.s4 1983009808
        %v1704 = vunpack.c.0.s8 %v1703
        %v1705 = vperm.slane %v1699, %v1704
        %v1707 = vunpack.c.l.s4 1983009808
        %v1708 = vunpack.c.0.s8 %v1707
        %v1709 = vperm.slane %v1701, %v1708
        %v1710 = vrot.slane %v1705, 4
        %v1711 = vsel %vm1686, %v1710, %v1693
        %v1712 = vrot.slane %v1693, 4
        %v1713 = vsel %vm1686, %v1705, %v1712
        %v1715 = vunpack.c.l.s4 1934713408
        %v1716 = vunpack.c.0.s8 %v1715
        %v1717 = vperm.slane %v1711, %v1716
        %v1719 = vunpack.c.l.s4 1934713408
        %v1720 = vunpack.c.0.s8 %v1719
        %v1721 = vperm.slane %v1713, %v1720
        %v1722 = vrot.slane %v1709, 4
        %v1723 = vsel %vm1686, %v1722, %v1697
        %v1724 = vrot.slane %v1697, 4
        %v1725 = vsel %vm1686, %v1709, %v1724
        %v1727 = vunpack.c.l.s4 1934713408
        %v1728 = vunpack.c.0.s8 %v1727
        %v1729 = vperm.slane %v1723, %v1728
        %v1731 = vunpack.c.l.s4 1934713408
        %v1732 = vunpack.c.0.s8 %v1731
        %v1733 = vperm.slane %v1725, %v1732
        %v1734 = vrot.slane %v1717, 4
        %v1735 = vsel %vm1686, 0.0, %v1734
        %v1736 = vrot.slane %v1721, 4
        %v1737 = vsel %vm1686, 0.0, %v1736
        %v1738 = vrot.slane %v1729, 4
        %v1739 = vsel %vm1686, 0.0, %v1738
        %v1740 = vrot.slane %v1733, 4
        %v1741 = vsel %vm1686, 0.0, %v1740
        %v1742 = vsel %vm1686, %v1736, %v1717
        %v1744 = vunpack.c.l.s4 1983009808
        %v1745 = vunpack.c.0.s8 %v1744
        %v1746 = vperm.slane %v1742, %v1745
        %v1747 = vrot.slane %v1737, 4
        %v1748 = vsel %vm1686, %v1747, %v1735
        %v1750 = vunpack.c.l.s4 1983009808
        %v1751 = vunpack.c.0.s8 %v1750
        %v1752 = vperm.slane %v1748, %v1751
        %v1753 = vsel %vm1686, %v1740, %v1729
        %v1755 = vunpack.c.l.s4 1983009808
        %v1756 = vunpack.c.0.s8 %v1755
        %v1757 = vperm.slane %v1753, %v1756
        %v1758 = vrot.slane %v1741, 4
        %v1759 = vsel %vm1686, %v1758, %v1739
        %v1761 = vunpack.c.l.s4 1983009808
        %v1762 = vunpack.c.0.s8 %v1761
        %v1763 = vperm.slane %v1759, %v1762
        %v1764 = vrot.slane %v1752, 4
        %v1765 = vsel %vm1686, %v1764, %v1746
        %v1766 = vrot.slane %v1746, 4
        %v1767 = vsel %vm1686, %v1752, %v1766
        %v1769 = vunpack.c.l.s4 1934713408
        %v1770 = vunpack.c.0.s8 %v1769
        %v1771 = vperm.slane %v1765, %v1770
        %v1773 = vunpack.c.l.s4 1934713408
        %v1774 = vunpack.c.0.s8 %v1773
        %v1775 = vperm.slane %v1767, %v1774
        %v1776 = vrot.slane %v1763, 4
        %v1777 = vsel %vm1686, %v1776, %v1757
        %v1778 = vrot.slane %v1757, 4
        %v1779 = vsel %vm1686, %v1763, %v1778
        %v1781 = vunpack.c.l.s4 1934713408
        %v1782 = vunpack.c.0.s8 %v1781
        %v1783 = vperm.slane %v1777, %v1782
        %v1785 = vunpack.c.l.s4 1934713408
        %v1786 = vunpack.c.0.s8 %v1785
        %v1787 = vperm.slane %v1779, %v1786
        %v1788 = vrot.slane %v1783, 4
        %v1789 = vsel %vm1686, %v1788, %v1771
        %v1790 = vrot.slane %v1771, 4
        %v1791 = vsel %vm1686, %v1783, %v1790
        %v1792 = vrot.slane %v1787, 4
        %v1793 = vsel %vm1686, %v1792, %v1775
        %v1794 = vrot.slane %v1775, 4
        %v1795 = vsel %vm1686, %v1787, %v1794
        %1797 = vrot.lane.b32.xlu0 %v1791, 8
        %v1798 = vpop.permute.xlu0 %1797
        %1801 = vrot.lane.b32.xlu0 %v1793, 16
        %v1802 = vpop.permute.xlu0 %1801
        %1805 = vrot.lane.b32.xlu0 %v1795, 24
        %v1806 = vpop.permute.xlu0 %1805
        %v1808 = vsel %vm1483, %v1789, %v1798
        %vm1809 = vcmask 130048
        %v1810 = vsel %vm1809, %v1808, %v1802
        %vm1811 = vcmask 195584
        %v1812 = vsel %vm1811, %v1810, %v1806
        %v1813 = vpack.c.bf16 %v1812, %v1812
        %v1814 = vld [vmem:[%s808] sm:$0xf]
        %v1815 = vld [vmem:[%s808 + $0x4] sm:$0xf]
        %v1816 = vld [vmem:[%s808 + $0x8] sm:$0xf]
        %v1817 = vld [vmem:[%s808 + $0xc] sm:$0xf]
        %v1818 = vld [vmem:[%s980] sm:$0x1]
        %v1820 = vperm.slane %v1818, 0
        %v1826 = vunpack.c.l.b16 %v1814
        %v1827 = vunpack.c.l.b16 %v1815
        %v1828 = vunpack.c.l.b16 %v1816
        %v1829 = vunpack.c.l.b16 %v1817
        %v1830 = vpack.c.b16 %v1827, %v1826
        %v1831 = vpack.c.b16 %v1829, %v1828
        %v1835 = vsel %vm1028, %v1813, 0
        %1837 = vmatpush.bf16.msra.mxu0 0
        %1838 = vmatpush.bf16.msra.mxu0 0
        %1839 = vmatpush.bf16.msra.mxu0 0
        %1840 = vmatpush.bf16.msra.mxu0 0
        %1841 = vmatpush.bf16.msra.mxu0 0
        %1842 = vmatpush.bf16.msra.mxu0 0
        %1843 = vmatpush.bf16.msra.mxu0 %v1831
        %1844 = vmatpush.bf16.msra.mxu0 %v1830
        %1845 = vmatmul.bf16.gmra.mxu0 %v1835
        %v1846 = vpop.f32.mrf.mxu0
        %v1847 = vadd.f32 %v1820, %v1846
        %v1848 = vpop.f32.mrf.mxu0
        %1849 = vdwg.mxu0
        %v1850 = vadd.f32 %v1006, %v1847
        %v1851 = vld [vmem:[%s983] sm:$0x1]
        %v1852 = vld [vmem:[%s817] sm:$0x1]
        %v1853 = vsel %vm1028, %v1850, 0.0
        %1854 = vadd.xlane.f32.xlu0 %v1853
        %v1855 = vpop.xlane.xlu0 %1854
        %v1856 = vrcp.pop 32.0
        %v1857 = vmul.f32 32.0, %v1856
        %v1858 = vsub.f32 1.0, %v1857
        %v1859 = vmul.f32 %v1856, %v1858
        %v1860 = vadd.f32 %v1856, %v1859
        %vm1861 = vweird.f32 %v1856
        %v1862 = vsel %vm1861, %v1856, %v1860
        %v1863 = vmul.f32 %v1855, %v1862
        %v1864 = vsub.f32 %v1850, %v1863
        %v1865 = vmul.f32 %v1864, %v1864
        %v1866 = vsel %vm1028, %v1865, 0.0
        %1867 = vadd.xlane.f32.xlu0 %v1866
        %v1868 = vpop.xlane.xlu0 %1867
        %v1869 = vmul.f32 %v1868, %v1862
        %v1870 = vadd.f32 %v1869, 1e-05
        %v1871 = vrsqrt.pop %v1870
        %v1872 = vmul.f32 %v1871, %v1870
        %v1873 = vmul.f32 %v1872, %v1871
        %v1874 = vmul.f32 0.5, %v1873
        %v1875 = vsub.f32 1.5, %v1874
        %v1876 = vmul.f32 %v1871, %v1875
        %vm1877 = vweird.f32 %v1870
        %vm1878 = vweird.f32 %v1871
        %vm1879 = vmor %vm1877, %vm1878
        %v1880 = vsel %vm1879, %v1871, %v1876
        %v1881 = vmul.f32 %v1864, %v1880
        %v1883 = vperm.slane %v1851, 0
        %v1885 = vmul.f32 %v1881, %v1883
        %v1887 = vperm.slane %v1852, 0
        %v1889 = vadd.f32 %v1885, %v1887
        %v1890 = vpack.c.bf16 %v1889, %v1889
        %v1891 = vld [vmem:[%s827] sm:$0xf]
        %v1892 = vld [vmem:[%s827 + $0x4] sm:$0xf]
        %v1893 = vld [vmem:[%s827 + $0x8] sm:$0xf]
        %v1894 = vld [vmem:[%s827 + $0xc] sm:$0xf]
        %v1895 = vld [vmem:[%s986] sm:$0x1]
        %v1897 = vperm.slane %v1895, 0
        %v1903 = vunpack.c.l.b16 %v1891
        %v1904 = vunpack.c.l.b16 %v1892
        %v1905 = vunpack.c.l.b16 %v1893
        %v1906 = vunpack.c.l.b16 %v1894
        %v1907 = vpack.c.b16 %v1904, %v1903
        %v1908 = vpack.c.b16 %v1906, %v1905
        %v1912 = vsel %vm1028, %v1890, 0
        %1914 = vmatpush.bf16.msra.mxu0 0
        %1915 = vmatpush.bf16.msra.mxu0 0
        %1916 = vmatpush.bf16.msra.mxu0 0
        %1917 = vmatpush.bf16.msra.mxu0 0
        %1918 = vmatpush.bf16.msra.mxu0 0
        %1919 = vmatpush.bf16.msra.mxu0 0
        %1920 = vmatpush.bf16.msra.mxu0 %v1908
        %1921 = vmatpush.bf16.msra.mxu0 %v1907
        %1922 = vmatmul.bf16.gmra.mxu0 %v1912
        %v1923 = vpop.f32.mrf.mxu0
        %v1924 = vadd.f32 %v1897, %v1923
        %v1925 = vpop.f32.mrf.mxu0
        %1926 = vdwg.mxu0
        %v1927 = vmul.f32 %v1924, 0.5
        %v1928 = vmul.f32 %v1924, 0.70710677
        %v1929 = vmul.f32 %v1928, %v1928
        %v1930 = vmin.f32 16.0, %v1929
        %v1931 = vmul.f32 %v1930, 2.1237322e-06
        %v1932 = vadd.f32 %v1931, 0.00028619796
        %v1933 = vmul.f32 %v1930, %v1932
        %v1934 = vadd.f32 %v1933, 0.0036580483
        %v1935 = vmul.f32 %v1930, %v1934
        %v1936 = vadd.f32 %v1935, 0.05243302
        %v1937 = vmul.f32 %v1930, %v1936
        %v1938 = vadd.f32 %v1937, 0.18741608
        %v1939 = vmul.f32 %v1930, %v1938
        %v1940 = vadd.f32 %v1939, 1.1283791
        %v1941 = vmul.f32 %v1928, %v1940
        %v1942 = vmul.f32 %v1930, 3.8918573e-05
        %v1943 = vadd.f32 %v1942, 0.001143296
        %v1944 = vmul.f32 %v1930, %v1943
        %v1945 = vadd.f32 %v1944, 0.014752088
        %v1946 = vmul.f32 %v1930, %v1945
        %v1947 = vadd.f32 %v1946, 0.112945676
        %v1948 = vmul.f32 %v1930, %v1947
        %v1949 = vadd.f32 %v1948, 0.4994258
        %v1950 = vmul.f32 %v1930, %v1949
        %v1951 = vadd.f32 %v1950, 1.0
        %v1952 = vrcp.pop %v1951
        %v1953 = vmul.f32 %v1951, %v1952
        %v1954 = vsub.f32 1.0, %v1953
        %v1955 = vmul.f32 %v1952, %v1954
        %v1956 = vadd.f32 %v1952, %v1955
        %vm1957 = vweird.f32 %v1951
        %vm1958 = vweird.f32 %v1952
        %vm1959 = vmor %vm1957, %vm1958
        %v1960 = vsel %vm1959, %v1952, %v1956
        %v1961 = vand.u32 2147483647, %v1951
        %vm1962 = vcmp.eq.f32.partialorder %v1961, 8.507059e+37
        %v1963 = vand.u32 %v1951, 2147483648
        %v1964 = vor.u32 1.1754944e-38, %v1963
        %v1965 = vsel %vm1962, %v1964, %v1960
        %v1966 = vmul.f32 %v1941, %v1965
        %v1967 = vmin.f32 %v1966, 1.0
        %v1968 = vmax.f32 %v1967, -1.0
        %v1969 = vadd.f32 %v1968, 1.0
        %v1970 = vmul.f32 %v1927, %v1969
        %v1971 = vpack.c.bf16 %v1970, %v1970
        %v1972 = vld [vmem:[%s991] sm:$0xf]
        %v1973 = vld [vmem:[%s991 + $0x4] sm:$0xf]
        %v1974 = vld [vmem:[%s991 + $0x8] sm:$0xf]
        %v1975 = vld [vmem:[%s991 + $0xc] sm:$0xf]
        %v1976 = vld [vmem:[%s991 + $0x10] sm:$0xf]
        %v1977 = vld [vmem:[%s991 + $0x14] sm:$0xf]
        %v1978 = vld [vmem:[%s991 + $0x18] sm:$0xf]
        %v1979 = vld [vmem:[%s991 + $0x1c] sm:$0xf]
        %v1980 = vld [vmem:[%s994] sm:$0x1]
        %v1982 = vperm.slane %v1980, 0
        %v1992 = vunpack.c.l.b16 %v1972
        %v1993 = vunpack.c.l.b16 %v1973
        %v1994 = vunpack.c.l.b16 %v1974
        %v1995 = vunpack.c.l.b16 %v1975
        %v1996 = vunpack.c.l.b16 %v1976
        %v1997 = vunpack.c.l.b16 %v1977
        %v1998 = vunpack.c.l.b16 %v1978
        %v1999 = vunpack.c.l.b16 %v1979
        %v2000 = vpack.c.b16 %v1993, %v1992
        %v2001 = vpack.c.b16 %v1995, %v1994
        %v2002 = vpack.c.b16 %v1997, %v1996
        %v2003 = vpack.c.b16 %v1999, %v1998
        %vm2008 = vcmask 523264
        %v2010 = vsel %vm2008, %v1971, 0
        %2012 = vmatpush.bf16.msra.mxu0 0
        %2013 = vmatpush.bf16.msra.mxu0 0
        %2014 = vmatpush.bf16.msra.mxu0 0
        %2015 = vmatpush.bf16.msra.mxu0 0
        %2016 = vmatpush.bf16.msra.mxu0 %v2003
        %2017 = vmatpush.bf16.msra.mxu0 %v2002
        %2018 = vmatpush.bf16.msra.mxu0 %v2001
        %2019 = vmatpush.bf16.msra.mxu0 %v2000
        %2020 = vmatmul.bf16.gmra.mxu0 %v2010
        %v2021 = vpop.f32.mrf.mxu0
        %v2022 = vadd.f32 %v1982, %v2021
        %v2023 = vpop.f32.mrf.mxu0
        %2024 = vdwg.mxu0
        %v2025 = vadd.f32 %v1889, %v2022
        %v2026 = vld [vmem:[%s997] sm:$0x1]
        %v2027 = vld [vmem:[%s836] sm:$0x1]
        %v2028 = vsel %vm1028, %v2025, 0.0
        %2029 = vadd.xlane.f32.xlu0 %v2028
        %v2030 = vpop.xlane.xlu0 %2029
        %v2031 = vmul.f32 %v2030, %v1862
        %v2032 = vsub.f32 %v2025, %v2031
        %v2033 = vmul.f32 %v2032, %v2032
        %v2034 = vsel %vm1028, %v2033, 0.0
        %2035 = vadd.xlane.f32.xlu0 %v2034
        %v2036 = vpop.xlane.xlu0 %2035
        %v2037 = vmul.f32 %v2036, %v1862
        %v2038 = vadd.f32 %v2037, 1e-05
        %v2039 = vrsqrt.pop %v2038
        %v2040 = vmul.f32 %v2039, %v2038
        %v2041 = vmul.f32 %v2040, %v2039
        %v2042 = vmul.f32 0.5, %v2041
        %v2043 = vsub.f32 1.5, %v2042
        %v2044 = vmul.f32 %v2039, %v2043
        %vm2045 = vweird.f32 %v2038
        %vm2046 = vweird.f32 %v2039
        %vm2047 = vmor %vm2045, %vm2046
        %v2048 = vsel %vm2047, %v2039, %v2044
        %v2049 = vmul.f32 %v2032, %v2048
        %v2051 = vperm.slane %v2026, 0
        %v2053 = vmul.f32 %v2049, %v2051
        %v2055 = vperm.slane %v2027, 0
        %v2057 = vadd.f32 %v2053, %v2055
        %2058 = vst.msk [vmem:[%s956] sm:$0xff] %vm1028, %v2057
        %s2059 = sand.u32 %s532, 1
        %s2060 = scalar_lea.sflag [#allocation4], %s2059
        %s2061 = sand.u32 %s532, 1
        %s2062 = smul.addr %s2061, 8
        %s2063 = scalar_lea.vmem [#allocation14], %s2062
        // Predicated region
        $region125: #{tpu_custom_call.1} parent=91 // pred_check
          %p2064 = pneg %p542
        $region126: #{tpu_custom_call.1} parent=91 // pred_check_branch
          %2066 = sbr.rel (%p2064) target = $region128
        $region127: #{tpu_custom_call.1} parent=91 // pred_region
          %2068 = vsyncadd %s2060, 0
          %s2069 = smul.addr %s48, 8
          %s2070 = scalar_lea.hbm %s18, %s2069
          %s2072 = sshll.u32 %s2063, 4
          %s2073 = int_to_ptr.vmem [resolvable:$true] %s2072
          %s2074 = sshll.u32 %s2070, 4
          %s2075 = int_to_ptr.hbm [resolvable:$true] %s2074
          %2077 = dma.vmem_to_hbm [thread:$0]  %s2073, 128, %s2075, %s2060
        $region128: #{tpu_custom_call.1} parent=91 // pred_fallthru
          _
      $region92: #{tpu_custom_call.1} parent=5 // pred_fallthru
        _
      %p2078 = scmp.le.s32.totalorder 2, %s39
      // Predicated region
      $region129: #{tpu_custom_call.1} parent=5 // pred_check
        %p2079 = pneg %p2078
      $region130: #{tpu_custom_call.1} parent=5 // pred_check_branch
        %2081 = sbr.rel (%p2079) target = $region132
      $region131: #{tpu_custom_call.1} parent=5 // pred_region
        %s2082 = ssub.s32 %s39, 2
        // Predicated region
        $region133: #{tpu_custom_call.1} parent=131 // pred_check
          %p2083 = pneg %p548
        $region134: #{tpu_custom_call.1} parent=131 // pred_check_branch
          %2085 = sbr.rel (%p2083) target = $region136
        $region135: #{tpu_custom_call.1} parent=131 // pred_region
          %s2086 = sand.u32 %s533, 1
          %s2087 = scalar_lea.sflag [#allocation4], %s2086
          %s2088 = sand.u32 %s533, 1
          %s2089 = smul.addr %s2088, 8
          %s2090 = scalar_lea.vmem [#allocation14], %s2089
          %2092 = dma.done %s2087, 128
        $region136: #{tpu_custom_call.1} parent=131 // pred_fallthru
          _
      $region132: #{tpu_custom_call.1} parent=5 // pred_fallthru
        _
    $region6: #{tpu_custom_call.1} parent=1 // loop_footer
      %s43 = sadd.s32 1, %s39
    $region7: #{tpu_custom_call.1} parent=1 // loop_footer_branch
      %38 = sbr.rel target = $region3
    $region8: #{tpu_custom_call.1} parent=1 // loop_exit
      _
    %2093 = vsyncpa [#allocation3], 1
    %s2094 = scalar_lea.sflag [#allocation3], 1
    %2095 = vsyncpa %s2094, 1
    %2096 = vsyncpa [#allocation6], 1
    %s2097 = scalar_lea.sflag [#allocation6], 1
    %2098 = vsyncpa %s2097, 1
    %2099 = vsyncpa [#allocation9], 1
    %s2100 = scalar_lea.sflag [#allocation9], 1
    %2101 = vsyncpa %s2100, 1
    %2102 = vsyncpa [#allocation12], 1
    %s2103 = scalar_lea.sflag [#allocation12], 1
    %2104 = vsyncpa %s2103, 1
    %2105 = vsyncpa [#allocation4], 1
    %s2106 = scalar_lea.sflag [#allocation4], 1
    %2107 = vsyncpa %s2106, 1

</llo_original>
